<compile_context>
chip_gen: v7x
topology: tpu7x:2x2x1
jax: 0.10.0
libtpu: 0.0.40
codegen_flags: <defaults>
</compile_context>

<pallas_src>
import functools

import jax
import jax.numpy as jnp
from jax.experimental import pallas as pl
from jax.experimental.pallas import tpu as pltpu

EPS = 1e-5
LANES = 128          # lane-dense padded feature width
NUM_LAYERS = 5


# ----------------------------------------------------------------------------
# Fused Pallas kernel: A_hat norm + 5 x (GCNConv + BN + ReLU) + pool
# ----------------------------------------------------------------------------
def _fused_gnn_kernel(a_ref, dc_ref, dr_ref, x_ref, w_ref, g_ref, beta_ref,
                      p_ref, o_ref, *, num_layers, inv_n):
    """a_ref:    (N, N)     bf16  raw A + I (padded rows/cols all-zero)
       dc_ref:   (N, 1)     f32   D^-1/2 (column orientation, 0 on padding)
       dr_ref:   (1, N)     f32   D^-1/2 (row orientation,   0 on padding)
       x_ref:    (N, F)     f32   node features, zero-padded to F=128 lanes
       w_ref:    (L, F, F)  bf16  padded GCN weights (zero rows/cols in pad)
       g_ref:    (L, 1, F)  f32   padded BN gammas (0 in pad lanes)
       beta_ref: (L, 1, F)  f32   padded BN betas  (0 in pad lanes)
       p_ref:    (G, N)     bf16  pooling matrix (index_select + add_pool)
       o_ref:    (G, F)     f32   pooled output (pad rows/lanes sliced outside)
    """
    # Normalize adjacency once in VMEM: A_hat = D^-1/2 (A + I) D^-1/2.
    a = (a_ref[...].astype(jnp.float32) * dc_ref[...] * dr_ref[...]
         ).astype(jnp.bfloat16)                 # stays resident for all layers
    h = x_ref[...]                              # f32 running node features

    for i in range(num_layers):                 # fully unrolled, 5 layers
        # GCNConv: A_hat @ (X W)   (bf16 MXU inputs, f32 accumulation).
        # Bias omitted: cancelled exactly by the BN mean-centering below.
        xw = jnp.dot(h.astype(jnp.bfloat16), w_ref[i],
                     preferred_element_type=jnp.float32)
        z = jnp.dot(a, xw.astype(jnp.bfloat16),
                    preferred_element_type=jnp.float32)

        # BatchNorm1d (training-mode batch stats) folded to scale+shift.
        # Padded node rows of z are exactly 0, so sums over all rows divided
        # by the REAL node count give the exact statistics.
        s = jnp.sum(z, axis=0, keepdims=True)
        ss = jnp.sum(z * z, axis=0, keepdims=True)
        mean = s * inv_n
        var = jnp.maximum(ss * inv_n - mean * mean, 0.0)
        scale = g_ref[i] * jax.lax.rsqrt(var + EPS)      # (1, F)
        shift = beta_ref[i] - mean * scale               # (1, F)
        y = z * scale + shift

        if i < num_layers - 1:                  # ReLU on layers 1..4
            y = jnp.maximum(y, 0.0)
        h = y

    # index_select(mut_idx) + global_add_pool == P @ h  (bf16 MXU, f32 acc;
    # P is exact 0/1 so the bf16 cast is lossless).
    o_ref[...] = jnp.dot(p_ref[...], h.astype(jnp.bfloat16),
                         preferred_element_type=jnp.float32)


def _vmem_spec():
    return pl.BlockSpec(memory_space=pltpu.MemorySpace.VMEM)


def fused_gnn(a_raw_bf16, dinv_col, dinv_row, x_pad, w_all, g_all, beta_all,
              pool_mat_bf16, num_real_nodes):
    n_pad, f = x_pad.shape
    g_pad = pool_mat_bf16.shape[0]
    num_layers = w_all.shape[0]

    kernel = functools.partial(_fused_gnn_kernel, num_layers=num_layers,
                               inv_n=1.0 / float(num_real_nodes))

    flops = (num_layers * (2 * n_pad * f * f + 2 * n_pad * n_pad * f)
             + 2 * g_pad * n_pad * f
             + 3 * n_pad * n_pad)                       # A_hat normalization
    bytes_accessed = (2 * n_pad * n_pad + 8 * n_pad + 4 * n_pad * f
                      + num_layers * (2 * f * f + 8 * f)
                      + 2 * g_pad * n_pad + 4 * g_pad * f)
    transcendentals = num_layers * f + n_pad            # rsqrt per BN + A norm

    # VMEM footprint: raw A (bf16) + f32 temp + normalized A (bf16),
    # a few f32 (N, 128) activations, packed params, pool matrix, output.
    footprint = (8 * n_pad * n_pad
                 + 16 * n_pad * f
                 + num_layers * (2 * f * f + 8 * f)
                 + 2 * g_pad * n_pad + 4 * g_pad * f)
    vmem_limit = int(min(max(3 * footprint, 16 * 1024 * 1024),
                         48 * 1024 * 1024))             # v7x-safe cap

    return pl.pallas_call(
        kernel,
        out_shape=jax.ShapeDtypeStruct((g_pad, f), jnp.float32),
        in_specs=[_vmem_spec() for _ in range(8)],
        out_specs=_vmem_spec(),
        cost_estimate=pl.CostEstimate(flops=flops,
                                      transcendentals=transcendentals,
                                      bytes_accessed=bytes_accessed),
        compiler_params=pltpu.CompilerParams(vmem_limit_bytes=vmem_limit),
    )(a_raw_bf16, dinv_col, dinv_row, x_pad, w_all, g_all, beta_all,
      pool_mat_bf16)


# ----------------------------------------------------------------------------
# Glue: raw adjacency, degrees, pooling matrix, parameter init/packing, forward
# ----------------------------------------------------------------------------
def _round_up(v, m):
    return (v + m - 1) // m * m


def build_raw_adjacency(edge_index, edge_weight, num_nodes, n_pad):
    """A + I with A[dst, src] = w (PyG convention); padded rows/cols stay 0
    (no self-loops on padding, so padding never contaminates BN statistics)."""
    src = edge_index[0]
    dst = edge_index[1]
    a = jnp.zeros((n_pad, n_pad), jnp.float32)
    a = a.at[dst, src].add(edge_weight.astype(jnp.float32))
    diag = jnp.arange(num_nodes)
    a = a.at[diag, diag].add(1.0)
    return a


def build_pool_matrix(mut_idx, batch, n_pad, g_pad):
    """index_select(x, 0, mut_idx) then global_add_pool(., batch[mut_idx])."""
    sel_batch = batch[mut_idx]
    p = jnp.zeros((g_pad, n_pad), jnp.float32)
    p = p.at[sel_batch, mut_idx].add(1.0)
    return p


def init_params(key, num_features, hidden_dim):
    dims = [
        (num_features, hidden_dim),
        (hidden_dim, hidden_dim * 2),
        (hidden_dim * 2, hidden_dim * 4),
        (hidden_dim * 4, hidden_dim * 4),
        (hidden_dim * 4, hidden_dim * 2),
    ]
    params = []
    for (fin, fout) in dims:
        key, kw, kb = jax.random.split(key, 3)
        w = jax.random.normal(kw, (fin, fout), jnp.float32) * (1.0 / jnp.sqrt(fin))
        b = jax.random.normal(kb, (1, fout), jnp.float32) * 0.01
        gamma = jnp.ones((1, fout), jnp.float32)   # BatchNorm1d default init
        beta = jnp.zeros((1, fout), jnp.float32)
        params.append((w, b, gamma, beta))
    return params


def pack_params(params, lanes=LANES):
    """Zero-pad every layer to (lanes, lanes) and stack; done once per model.
    The GCN bias is intentionally NOT packed: a per-feature constant added
    immediately before training-mode BatchNorm is removed exactly by the
    mean-centering, so it is mathematically inert in this forward pass."""
    num_layers = len(params)
    w_all = jnp.zeros((num_layers, lanes, lanes), jnp.float32)
    g_all = jnp.zeros((num_layers, 1, lanes), jnp.float32)
    beta_all = jnp.zeros((num_layers, 1, lanes), jnp.float32)
    for i, (w, _b, gamma, beta) in enumerate(params):
        fin, fout = w.shape
        assert fin <= lanes and fout <= lanes
        w_all = w_all.at[i, :fin, :fout].set(w)
        g_all = g_all.at[i, :, :fout].set(gamma)
        beta_all = beta_all.at[i, :, :fout].set(beta)
    return w_all.astype(jnp.bfloat16), g_all, beta_all


@functools.partial(jax.jit, static_argnames=("num_graphs", "out_dim"))
def gnn_msp_forward(x, edge_index, edge_weight, mut_idx, batch,
                    w_all, g_all, beta_all, num_graphs, out_dim):
    n, fin = x.shape
    lanes = w_all.shape[-1]
    n_pad = _round_up(n, 16)            # bf16 sublane packing for A
    g_pad = _round_up(num_graphs, 8)    # unmasked f32 sublane stores

    a_raw = build_raw_adjacency(edge_index, edge_weight, n, n_pad)
    deg = jnp.sum(a_raw, axis=1)
    dinv = jnp.where(deg > 0, jax.lax.rsqrt(deg), 0.0)
    dinv_col = dinv[:, None]            # (n_pad, 1)
    dinv_row = dinv[None, :]            # (1, n_pad)

    pool_mat = build_pool_matrix(mut_idx, batch, n_pad, g_pad)
    x_pad = jnp.zeros((n_pad, lanes), jnp.float32).at[:n, :fin].set(
        x.astype(jnp.float32))

    out = fused_gnn(a_raw.astype(jnp.bfloat16), dinv_col, dinv_row, x_pad,
                    w_all, g_all, beta_all, pool_mat.astype(jnp.bfloat16),
                    num_real_nodes=n)
    return out[:num_graphs, :out_dim]


# ----------------------------------------------------------------------------
if __name__ == "__main__":
    num_nodes = 64
    num_features = 16
    hidden_dim = 32
    num_edges = 128
    num_graphs = 2
    num_mut = 8

    key = jax.random.PRNGKey(0)
    kx, ke1, ke2, kw, km, kp = jax.random.split(key, 6)

    x = jax.random.normal(kx, (num_nodes, num_features), jnp.float32)
    src = jax.random.randint(ke1, (num_edges,), 0, num_nodes, jnp.int32)
    dst = jax.random.randint(ke2, (num_edges,), 0, num_nodes, jnp.int32)
    edge_index = jnp.stack([src, dst], axis=0)
    edge_weight = jax.random.uniform(kw, (num_edges,), jnp.float32, 0.1, 1.0)

    # batch assignment: first half -> graph 0, second half -> graph 1
    batch = jnp.concatenate([
        jnp.zeros((num_nodes // 2,), jnp.int32),
        jnp.ones((num_nodes - num_nodes // 2,), jnp.int32),
    ])
    mut_idx = jax.random.choice(km, num_nodes, shape=(num_mut,), replace=False)
    mut_idx = mut_idx.astype(jnp.int32)

    params = init_params(kp, num_features, hidden_dim)
    w_all, g_all, beta_all = pack_params(params)

    out = gnn_msp_forward(x, edge_index, edge_weight, mut_idx, batch,
                          w_all, g_all, beta_all,
                          num_graphs=num_graphs, out_dim=hidden_dim * 2)
    out = jax.block_until_ready(out)

    assert out.shape == (num_graphs, hidden_dim * 2), out.shape
    assert jnp.all(jnp.isfinite(out))
    print("KERNEL_OK")
</pallas_src>

<mosaic_0001>
module attributes {stable_mosaic.version = 11 : i64} {
  func.func private @main(%arg0: i32) attributes {dimension_semantics = [#tpu.dimension_semantics<core_parallel>], iteration_bounds = array<i64: 2>, tpu.core_type = #tpu.core_type<sc_scalar_subcore>, window_params = []} {
    return
  }
}

module attributes {stable_mosaic.version = 11 : i64} {
  func.func private @main(%arg0: i32) attributes {dimension_semantics = [#tpu.dimension_semantics<core_parallel>], iteration_bounds = array<i64: 2>, tpu.core_type = #tpu.core_type<sc_scalar_subcore>, window_params = []} {
    return
  }
}

module attributes {stable_mosaic.version = 11 : i64} {
  func.func @_fused_gnn_kernel(%arg0: memref<64x64xbf16, #tpu.memory_space<vmem>>, %arg1: memref<64x1xf32, #tpu.memory_space<vmem>>, %arg2: memref<1x64xf32, #tpu.memory_space<vmem>>, %arg3: memref<64x128xf32, #tpu.memory_space<vmem>>, %arg4: memref<5x128x128xbf16, #tpu.memory_space<vmem>>, %arg5: memref<5x1x128xf32, #tpu.memory_space<vmem>>, %arg6: memref<5x1x128xf32, #tpu.memory_space<vmem>>, %arg7: memref<8x64xbf16, #tpu.memory_space<vmem>>, %arg8: memref<8x128xf32, #tpu.memory_space<vmem>>) attributes {dimension_semantics = [], scalar_prefetch = 0 : i64, scratch_operands = 0 : i64, tpu.core_type = #tpu.core_type<tc>} {
    %c0 = arith.constant 0 : index
    %c0_0 = arith.constant 0 : index
    %0 = vector.load %arg0[%c0, %c0_0] : memref<64x64xbf16, #tpu.memory_space<vmem>>, vector<64x64xbf16>
    %1 = arith.extf %0 : vector<64x64xbf16> to vector<64x64xf32>
    %c0_1 = arith.constant 0 : index
    %c0_2 = arith.constant 0 : index
    %2 = vector.load %arg1[%c0_1, %c0_2] : memref<64x1xf32, #tpu.memory_space<vmem>>, vector<64x1xf32>
    %3 = vector.broadcast %2 : vector<64x1xf32> to vector<64x64xf32>
    %4 = arith.mulf %1, %3 : vector<64x64xf32>
    %c0_3 = arith.constant 0 : index
    %c0_4 = arith.constant 0 : index
    %5 = vector.load %arg2[%c0_3, %c0_4] : memref<1x64xf32, #tpu.memory_space<vmem>>, vector<1x64xf32>
    %6 = vector.broadcast %5 : vector<1x64xf32> to vector<64x64xf32>
    %7 = arith.mulf %4, %6 : vector<64x64xf32>
    %8 = arith.truncf %7 : vector<64x64xf32> to vector<64x64xbf16>
    %c0_5 = arith.constant 0 : index
    %c0_6 = arith.constant 0 : index
    %9 = vector.load %arg3[%c0_5, %c0_6] : memref<64x128xf32, #tpu.memory_space<vmem>>, vector<64x128xf32>
    %10 = arith.truncf %9 : vector<64x128xf32> to vector<64x128xbf16>
    %c0_7 = arith.constant 0 : index
    %c0_8 = arith.constant 0 : index
    %c0_9 = arith.constant 0 : index
    %11 = vector.load %arg4[%c0_7, %c0_8, %c0_9] : memref<5x128x128xbf16, #tpu.memory_space<vmem>>, vector<1x128x128xbf16>
    %12 = vector.shape_cast %11 : vector<1x128x128xbf16> to vector<128x128xbf16>
    %cst = arith.constant dense<0.000000e+00> : vector<64x128xf32>
    %13 = tpu.matmul %10, %12, %cst {dimension_numbers = #tpu.dot_dimension_numbers<[1], [0], [0], [1], [0, 0, 1, 1], [], []>} : vector<64x128xbf16>, vector<128x128xbf16>, vector<64x128xf32> -> vector<64x128xf32>
    %14 = arith.truncf %13 : vector<64x128xf32> to vector<64x128xbf16>
    %cst_10 = arith.constant dense<0.000000e+00> : vector<64x128xf32>
    %15 = tpu.matmul %8, %14, %cst_10 {dimension_numbers = #tpu.dot_dimension_numbers<[1], [0], [0], [1], [0, 0, 1, 1], [], []>} : vector<64x64xbf16>, vector<64x128xbf16>, vector<64x128xf32> -> vector<64x128xf32>
    %cst_11 = arith.constant dense<0.000000e+00> : vector<128xf32>
    %16 = vector.multi_reduction <add>, %15, %cst_11 [0] : vector<64x128xf32> to vector<128xf32>
    %17 = vector.shape_cast %16 : vector<128xf32> to vector<1x128xf32>
    %18 = arith.mulf %15, %15 : vector<64x128xf32>
    %cst_12 = arith.constant dense<0.000000e+00> : vector<128xf32>
    %19 = vector.multi_reduction <add>, %18, %cst_12 [0] : vector<64x128xf32> to vector<128xf32>
    %20 = vector.shape_cast %19 : vector<128xf32> to vector<1x128xf32>
    %cst_13 = arith.constant 1.562500e-02 : f32
    %21 = vector.broadcast %cst_13 : f32 to vector<1x128xf32>
    %22 = arith.mulf %17, %21 : vector<1x128xf32>
    %cst_14 = arith.constant 1.562500e-02 : f32
    %23 = vector.broadcast %cst_14 : f32 to vector<1x128xf32>
    %24 = arith.mulf %20, %23 : vector<1x128xf32>
    %25 = arith.mulf %22, %22 : vector<1x128xf32>
    %26 = arith.subf %24, %25 : vector<1x128xf32>
    %cst_15 = arith.constant 0.000000e+00 : f32
    %27 = vector.broadcast %cst_15 : f32 to vector<1x128xf32>
    %28 = arith.maximumf %26, %27 : vector<1x128xf32>
    %c0_16 = arith.constant 0 : index
    %c0_17 = arith.constant 0 : index
    %c0_18 = arith.constant 0 : index
    %29 = vector.load %arg5[%c0_16, %c0_17, %c0_18] : memref<5x1x128xf32, #tpu.memory_space<vmem>>, vector<1x1x128xf32>
    %30 = vector.shape_cast %29 : vector<1x1x128xf32> to vector<1x128xf32>
    %cst_19 = arith.constant 9.99999974E-6 : f32
    %31 = vector.broadcast %cst_19 : f32 to vector<1x128xf32>
    %32 = arith.addf %28, %31 : vector<1x128xf32>
    %33 = math.rsqrt %32 : vector<1x128xf32>
    %34 = arith.mulf %30, %33 : vector<1x128xf32>
    %c0_20 = arith.constant 0 : index
    %c0_21 = arith.constant 0 : index
    %c0_22 = arith.constant 0 : index
    %35 = vector.load %arg6[%c0_20, %c0_21, %c0_22] : memref<5x1x128xf32, #tpu.memory_space<vmem>>, vector<1x1x128xf32>
    %36 = vector.shape_cast %35 : vector<1x1x128xf32> to vector<1x128xf32>
    %37 = arith.mulf %22, %34 : vector<1x128xf32>
    %38 = arith.subf %36, %37 : vector<1x128xf32>
    %39 = vector.broadcast %34 : vector<1x128xf32> to vector<64x128xf32>
    %40 = arith.mulf %15, %39 : vector<64x128xf32>
    %41 = vector.broadcast %38 : vector<1x128xf32> to vector<64x128xf32>
    %42 = arith.addf %40, %41 : vector<64x128xf32>
    %cst_23 = arith.constant 0.000000e+00 : f32
    %43 = vector.broadcast %cst_23 : f32 to vector<64x128xf32>
    %44 = arith.maximumf %42, %43 : vector<64x128xf32>
    %45 = arith.truncf %44 : vector<64x128xf32> to vector<64x128xbf16>
    %c1 = arith.constant 1 : index
    %c0_24 = arith.constant 0 : index
    %c0_25 = arith.constant 0 : index
    %46 = vector.load %arg4[%c1, %c0_24, %c0_25] : memref<5x128x128xbf16, #tpu.memory_space<vmem>>, vector<1x128x128xbf16>
    %47 = vector.shape_cast %46 : vector<1x128x128xbf16> to vector<128x128xbf16>
    %cst_26 = arith.constant dense<0.000000e+00> : vector<64x128xf32>
    %48 = tpu.matmul %45, %47, %cst_26 {dimension_numbers = #tpu.dot_dimension_numbers<[1], [0], [0], [1], [0, 0, 1, 1], [], []>} : vector<64x128xbf16>, vector<128x128xbf16>, vector<64x128xf32> -> vector<64x128xf32>
    %49 = arith.truncf %48 : vector<64x128xf32> to vector<64x128xbf16>
    %cst_27 = arith.constant dense<0.000000e+00> : vector<64x128xf32>
    %50 = tpu.matmul %8, %49, %cst_27 {dimension_numbers = #tpu.dot_dimension_numbers<[1], [0], [0], [1], [0, 0, 1, 1], [], []>} : vector<64x64xbf16>, vector<64x128xbf16>, vector<64x128xf32> -> vector<64x128xf32>
    %cst_28 = arith.constant dense<0.000000e+00> : vector<128xf32>
    %51 = vector.multi_reduction <add>, %50, %cst_28 [0] : vector<64x128xf32> to vector<128xf32>
    %52 = vector.shape_cast %51 : vector<128xf32> to vector<1x128xf32>
    %53 = arith.mulf %50, %50 : vector<64x128xf32>
    %cst_29 = arith.constant dense<0.000000e+00> : vector<128xf32>
    %54 = vector.multi_reduction <add>, %53, %cst_29 [0] : vector<64x128xf32> to vector<128xf32>
    %55 = vector.shape_cast %54 : vector<128xf32> to vector<1x128xf32>
    %cst_30 = arith.constant 1.562500e-02 : f32
    %56 = vector.broadcast %cst_30 : f32 to vector<1x128xf32>
    %57 = arith.mulf %52, %56 : vector<1x128xf32>
    %cst_31 = arith.constant 1.562500e-02 : f32
    %58 = vector.broadcast %cst_31 : f32 to vector<1x128xf32>
    %59 = arith.mulf %55, %58 : vector<1x128xf32>
    %60 = arith.mulf %57, %57 : vector<1x128xf32>
    %61 = arith.subf %59, %60 : vector<1x128xf32>
    %cst_32 = arith.constant 0.000000e+00 : f32
    %62 = vector.broadcast %cst_32 : f32 to vector<1x128xf32>
    %63 = arith.maximumf %61, %62 : vector<1x128xf32>
    %c1_33 = arith.constant 1 : index
    %c0_34 = arith.constant 0 : index
    %c0_35 = arith.constant 0 : index
    %64 = vector.load %arg5[%c1_33, %c0_34, %c0_35] : memref<5x1x128xf32, #tpu.memory_space<vmem>>, vector<1x1x128xf32>
    %65 = vector.shape_cast %64 : vector<1x1x128xf32> to vector<1x128xf32>
    %cst_36 = arith.constant 9.99999974E-6 : f32
    %66 = vector.broadcast %cst_36 : f32 to vector<1x128xf32>
    %67 = arith.addf %63, %66 : vector<1x128xf32>
    %68 = math.rsqrt %67 : vector<1x128xf32>
    %69 = arith.mulf %65, %68 : vector<1x128xf32>
    %c1_37 = arith.constant 1 : index
    %c0_38 = arith.constant 0 : index
    %c0_39 = arith.constant 0 : index
    %70 = vector.load %arg6[%c1_37, %c0_38, %c0_39] : memref<5x1x128xf32, #tpu.memory_space<vmem>>, vector<1x1x128xf32>
    %71 = vector.shape_cast %70 : vector<1x1x128xf32> to vector<1x128xf32>
    %72 = arith.mulf %57, %69 : vector<1x128xf32>
    %73 = arith.subf %71, %72 : vector<1x128xf32>
    %74 = vector.broadcast %69 : vector<1x128xf32> to vector<64x128xf32>
    %75 = arith.mulf %50, %74 : vector<64x128xf32>
    %76 = vector.broadcast %73 : vector<1x128xf32> to vector<64x128xf32>
    %77 = arith.addf %75, %76 : vector<64x128xf32>
    %cst_40 = arith.constant 0.000000e+00 : f32
    %78 = vector.broadcast %cst_40 : f32 to vector<64x128xf32>
    %79 = arith.maximumf %77, %78 : vector<64x128xf32>
    %80 = arith.truncf %79 : vector<64x128xf32> to vector<64x128xbf16>
    %c2 = arith.constant 2 : index
    %c0_41 = arith.constant 0 : index
    %c0_42 = arith.constant 0 : index
    %81 = vector.load %arg4[%c2, %c0_41, %c0_42] : memref<5x128x128xbf16, #tpu.memory_space<vmem>>, vector<1x128x128xbf16>
    %82 = vector.shape_cast %81 : vector<1x128x128xbf16> to vector<128x128xbf16>
    %cst_43 = arith.constant dense<0.000000e+00> : vector<64x128xf32>
    %83 = tpu.matmul %80, %82, %cst_43 {dimension_numbers = #tpu.dot_dimension_numbers<[1], [0], [0], [1], [0, 0, 1, 1], [], []>} : vector<64x128xbf16>, vector<128x128xbf16>, vector<64x128xf32> -> vector<64x128xf32>
    %84 = arith.truncf %83 : vector<64x128xf32> to vector<64x128xbf16>
    %cst_44 = arith.constant dense<0.000000e+00> : vector<64x128xf32>
    %85 = tpu.matmul %8, %84, %cst_44 {dimension_numbers = #tpu.dot_dimension_numbers<[1], [0], [0], [1], [0, 0, 1, 1], [], []>} : vector<64x64xbf16>, vector<64x128xbf16>, vector<64x128xf32> -> vector<64x128xf32>
    %cst_45 = arith.constant dense<0.000000e+00> : vector<128xf32>
    %86 = vector.multi_reduction <add>, %85, %cst_45 [0] : vector<64x128xf32> to vector<128xf32>
    %87 = vector.shape_cast %86 : vector<128xf32> to vector<1x128xf32>
    %88 = arith.mulf %85, %85 : vector<64x128xf32>
    %cst_46 = arith.constant dense<0.000000e+00> : vector<128xf32>
    %89 = vector.multi_reduction <add>, %88, %cst_46 [0] : vector<64x128xf32> to vector<128xf32>
    %90 = vector.shape_cast %89 : vector<128xf32> to vector<1x128xf32>
    %cst_47 = arith.constant 1.562500e-02 : f32
    %91 = vector.broadcast %cst_47 : f32 to vector<1x128xf32>
    %92 = arith.mulf %87, %91 : vector<1x128xf32>
    %cst_48 = arith.constant 1.562500e-02 : f32
    %93 = vector.broadcast %cst_48 : f32 to vector<1x128xf32>
    %94 = arith.mulf %90, %93 : vector<1x128xf32>
    %95 = arith.mulf %92, %92 : vector<1x128xf32>
    %96 = arith.subf %94, %95 : vector<1x128xf32>
    %cst_49 = arith.constant 0.000000e+00 : f32
    %97 = vector.broadcast %cst_49 : f32 to vector<1x128xf32>
    %98 = arith.maximumf %96, %97 : vector<1x128xf32>
    %c2_50 = arith.constant 2 : index
    %c0_51 = arith.constant 0 : index
    %c0_52 = arith.constant 0 : index
    %99 = vector.load %arg5[%c2_50, %c0_51, %c0_52] : memref<5x1x128xf32, #tpu.memory_space<vmem>>, vector<1x1x128xf32>
    %100 = vector.shape_cast %99 : vector<1x1x128xf32> to vector<1x128xf32>
    %cst_53 = arith.constant 9.99999974E-6 : f32
    %101 = vector.broadcast %cst_53 : f32 to vector<1x128xf32>
    %102 = arith.addf %98, %101 : vector<1x128xf32>
    %103 = math.rsqrt %102 : vector<1x128xf32>
    %104 = arith.mulf %100, %103 : vector<1x128xf32>
    %c2_54 = arith.constant 2 : index
    %c0_55 = arith.constant 0 : index
    %c0_56 = arith.constant 0 : index
    %105 = vector.load %arg6[%c2_54, %c0_55, %c0_56] : memref<5x1x128xf32, #tpu.memory_space<vmem>>, vector<1x1x128xf32>
    %106 = vector.shape_cast %105 : vector<1x1x128xf32> to vector<1x128xf32>
    %107 = arith.mulf %92, %104 : vector<1x128xf32>
    %108 = arith.subf %106, %107 : vector<1x128xf32>
    %109 = vector.broadcast %104 : vector<1x128xf32> to vector<64x128xf32>
    %110 = arith.mulf %85, %109 : vector<64x128xf32>
    %111 = vector.broadcast %108 : vector<1x128xf32> to vector<64x128xf32>
    %112 = arith.addf %110, %111 : vector<64x128xf32>
    %cst_57 = arith.constant 0.000000e+00 : f32
    %113 = vector.broadcast %cst_57 : f32 to vector<64x128xf32>
    %114 = arith.maximumf %112, %113 : vector<64x128xf32>
    %115 = arith.truncf %114 : vector<64x128xf32> to vector<64x128xbf16>
    %c3 = arith.constant 3 : index
    %c0_58 = arith.constant 0 : index
    %c0_59 = arith.constant 0 : index
    %116 = vector.load %arg4[%c3, %c0_58, %c0_59] : memref<5x128x128xbf16, #tpu.memory_space<vmem>>, vector<1x128x128xbf16>
    %117 = vector.shape_cast %116 : vector<1x128x128xbf16> to vector<128x128xbf16>
    %cst_60 = arith.constant dense<0.000000e+00> : vector<64x128xf32>
    %118 = tpu.matmul %115, %117, %cst_60 {dimension_numbers = #tpu.dot_dimension_numbers<[1], [0], [0], [1], [0, 0, 1, 1], [], []>} : vector<64x128xbf16>, vector<128x128xbf16>, vector<64x128xf32> -> vector<64x128xf32>
    %119 = arith.truncf %118 : vector<64x128xf32> to vector<64x128xbf16>
    %cst_61 = arith.constant dense<0.000000e+00> : vector<64x128xf32>
    %120 = tpu.matmul %8, %119, %cst_61 {dimension_numbers = #tpu.dot_dimension_numbers<[1], [0], [0], [1], [0, 0, 1, 1], [], []>} : vector<64x64xbf16>, vector<64x128xbf16>, vector<64x128xf32> -> vector<64x128xf32>
    %cst_62 = arith.constant dense<0.000000e+00> : vector<128xf32>
    %121 = vector.multi_reduction <add>, %120, %cst_62 [0] : vector<64x128xf32> to vector<128xf32>
    %122 = vector.shape_cast %121 : vector<128xf32> to vector<1x128xf32>
    %123 = arith.mulf %120, %120 : vector<64x128xf32>
    %cst_63 = arith.constant dense<0.000000e+00> : vector<128xf32>
    %124 = vector.multi_reduction <add>, %123, %cst_63 [0] : vector<64x128xf32> to vector<128xf32>
    %125 = vector.shape_cast %124 : vector<128xf32> to vector<1x128xf32>
    %cst_64 = arith.constant 1.562500e-02 : f32
    %126 = vector.broadcast %cst_64 : f32 to vector<1x128xf32>
    %127 = arith.mulf %122, %126 : vector<1x128xf32>
    %cst_65 = arith.constant 1.562500e-02 : f32
    %128 = vector.broadcast %cst_65 : f32 to vector<1x128xf32>
    %129 = arith.mulf %125, %128 : vector<1x128xf32>
    %130 = arith.mulf %127, %127 : vector<1x128xf32>
    %131 = arith.subf %129, %130 : vector<1x128xf32>
    %cst_66 = arith.constant 0.000000e+00 : f32
    %132 = vector.broadcast %cst_66 : f32 to vector<1x128xf32>
    %133 = arith.maximumf %131, %132 : vector<1x128xf32>
    %c3_67 = arith.constant 3 : index
    %c0_68 = arith.constant 0 : index
    %c0_69 = arith.constant 0 : index
    %134 = vector.load %arg5[%c3_67, %c0_68, %c0_69] : memref<5x1x128xf32, #tpu.memory_space<vmem>>, vector<1x1x128xf32>
    %135 = vector.shape_cast %134 : vector<1x1x128xf32> to vector<1x128xf32>
    %cst_70 = arith.constant 9.99999974E-6 : f32
    %136 = vector.broadcast %cst_70 : f32 to vector<1x128xf32>
    %137 = arith.addf %133, %136 : vector<1x128xf32>
    %138 = math.rsqrt %137 : vector<1x128xf32>
    %139 = arith.mulf %135, %138 : vector<1x128xf32>
    %c3_71 = arith.constant 3 : index
    %c0_72 = arith.constant 0 : index
    %c0_73 = arith.constant 0 : index
    %140 = vector.load %arg6[%c3_71, %c0_72, %c0_73] : memref<5x1x128xf32, #tpu.memory_space<vmem>>, vector<1x1x128xf32>
    %141 = vector.shape_cast %140 : vector<1x1x128xf32> to vector<1x128xf32>
    %142 = arith.mulf %127, %139 : vector<1x128xf32>
    %143 = arith.subf %141, %142 : vector<1x128xf32>
    %144 = vector.broadcast %139 : vector<1x128xf32> to vector<64x128xf32>
    %145 = arith.mulf %120, %144 : vector<64x128xf32>
    %146 = vector.broadcast %143 : vector<1x128xf32> to vector<64x128xf32>
    %147 = arith.addf %145, %146 : vector<64x128xf32>
    %cst_74 = arith.constant 0.000000e+00 : f32
    %148 = vector.broadcast %cst_74 : f32 to vector<64x128xf32>
    %149 = arith.maximumf %147, %148 : vector<64x128xf32>
    %150 = arith.truncf %149 : vector<64x128xf32> to vector<64x128xbf16>
    %c4 = arith.constant 4 : index
    %c0_75 = arith.constant 0 : index
    %c0_76 = arith.constant 0 : index
    %151 = vector.load %arg4[%c4, %c0_75, %c0_76] : memref<5x128x128xbf16, #tpu.memory_space<vmem>>, vector<1x128x128xbf16>
    %152 = vector.shape_cast %151 : vector<1x128x128xbf16> to vector<128x128xbf16>
    %cst_77 = arith.constant dense<0.000000e+00> : vector<64x128xf32>
    %153 = tpu.matmul %150, %152, %cst_77 {dimension_numbers = #tpu.dot_dimension_numbers<[1], [0], [0], [1], [0, 0, 1, 1], [], []>} : vector<64x128xbf16>, vector<128x128xbf16>, vector<64x128xf32> -> vector<64x128xf32>
    %154 = arith.truncf %153 : vector<64x128xf32> to vector<64x128xbf16>
    %cst_78 = arith.constant dense<0.000000e+00> : vector<64x128xf32>
    %155 = tpu.matmul %8, %154, %cst_78 {dimension_numbers = #tpu.dot_dimension_numbers<[1], [0], [0], [1], [0, 0, 1, 1], [], []>} : vector<64x64xbf16>, vector<64x128xbf16>, vector<64x128xf32> -> vector<64x128xf32>
    %cst_79 = arith.constant dense<0.000000e+00> : vector<128xf32>
    %156 = vector.multi_reduction <add>, %155, %cst_79 [0] : vector<64x128xf32> to vector<128xf32>
    %157 = vector.shape_cast %156 : vector<128xf32> to vector<1x128xf32>
    %158 = arith.mulf %155, %155 : vector<64x128xf32>
    %cst_80 = arith.constant dense<0.000000e+00> : vector<128xf32>
    %159 = vector.multi_reduction <add>, %158, %cst_80 [0] : vector<64x128xf32> to vector<128xf32>
    %160 = vector.shape_cast %159 : vector<128xf32> to vector<1x128xf32>
    %cst_81 = arith.constant 1.562500e-02 : f32
    %161 = vector.broadcast %cst_81 : f32 to vector<1x128xf32>
    %162 = arith.mulf %157, %161 : vector<1x128xf32>
    %cst_82 = arith.constant 1.562500e-02 : f32
    %163 = vector.broadcast %cst_82 : f32 to vector<1x128xf32>
    %164 = arith.mulf %160, %163 : vector<1x128xf32>
    %165 = arith.mulf %162, %162 : vector<1x128xf32>
    %166 = arith.subf %164, %165 : vector<1x128xf32>
    %cst_83 = arith.constant 0.000000e+00 : f32
    %167 = vector.broadcast %cst_83 : f32 to vector<1x128xf32>
    %168 = arith.maximumf %166, %167 : vector<1x128xf32>
    %c4_84 = arith.constant 4 : index
    %c0_85 = arith.constant 0 : index
    %c0_86 = arith.constant 0 : index
    %169 = vector.load %arg5[%c4_84, %c0_85, %c0_86] : memref<5x1x128xf32, #tpu.memory_space<vmem>>, vector<1x1x128xf32>
    %170 = vector.shape_cast %169 : vector<1x1x128xf32> to vector<1x128xf32>
    %cst_87 = arith.constant 9.99999974E-6 : f32
    %171 = vector.broadcast %cst_87 : f32 to vector<1x128xf32>
    %172 = arith.addf %168, %171 : vector<1x128xf32>
    %173 = math.rsqrt %172 : vector<1x128xf32>
    %174 = arith.mulf %170, %173 : vector<1x128xf32>
    %c4_88 = arith.constant 4 : index
    %c0_89 = arith.constant 0 : index
    %c0_90 = arith.constant 0 : index
    %175 = vector.load %arg6[%c4_88, %c0_89, %c0_90] : memref<5x1x128xf32, #tpu.memory_space<vmem>>, vector<1x1x128xf32>
    %176 = vector.shape_cast %175 : vector<1x1x128xf32> to vector<1x128xf32>
    %177 = arith.mulf %162, %174 : vector<1x128xf32>
    %178 = arith.subf %176, %177 : vector<1x128xf32>
    %179 = vector.broadcast %174 : vector<1x128xf32> to vector<64x128xf32>
    %180 = arith.mulf %155, %179 : vector<64x128xf32>
    %181 = vector.broadcast %178 : vector<1x128xf32> to vector<64x128xf32>
    %182 = arith.addf %180, %181 : vector<64x128xf32>
    %c0_91 = arith.constant 0 : index
    %c0_92 = arith.constant 0 : index
    %183 = vector.load %arg7[%c0_91, %c0_92] : memref<8x64xbf16, #tpu.memory_space<vmem>>, vector<8x64xbf16>
    %184 = arith.truncf %182 : vector<64x128xf32> to vector<64x128xbf16>
    %cst_93 = arith.constant dense<0.000000e+00> : vector<8x128xf32>
    %185 = tpu.matmul %183, %184, %cst_93 {dimension_numbers = #tpu.dot_dimension_numbers<[1], [0], [0], [1], [0, 0, 1, 1], [], []>} : vector<8x64xbf16>, vector<64x128xbf16>, vector<8x128xf32> -> vector<8x128xf32>
    %c0_94 = arith.constant 0 : index
    %c0_95 = arith.constant 0 : index
    %186 = vector.load %arg8[%c0_94, %c0_95] : memref<8x128xf32, #tpu.memory_space<vmem>>, vector<8x128xf32>
    tpu.vector_store %arg8[%c0_94, %c0_95], %185 {strides = array<i32>} : memref<8x128xf32, #tpu.memory_space<vmem>>, vector<8x128xf32>,
    return
  }
}

</mosaic_0001>

<llo_original>
// kernel: gnn_msp_forward.1
$region0: #{gnn_msp_forward.1}
  #allocation0 [shape = 'u32[]', space=smem, size = 0x4, offset = 0x4, fixed_abs, tag = 'smem constant byte address 0x4 - core index']
  #allocation1 [shape = 'u32[144,128]{1,0:T(1,128)}', space=vmem, size = 0x12000, scoped, tag = 'internal scratch']
  %s0 = inlined_call_operand.vmem [shape: bf16[64,64], index: 0, kind: input, shape index: {}]
  %s1 = inlined_call_operand.vmem [shape: f32[64,1], index: 1, kind: input, shape index: {}]
  %s2 = inlined_call_operand.vmem [shape: f32[1,64], index: 2, kind: input, shape index: {}]
  %s3 = inlined_call_operand.vmem [shape: f32[64,128], index: 3, kind: input, shape index: {}]
  %s4 = inlined_call_operand.vmem [shape: bf16[5,128,128], index: 4, kind: input, shape index: {}]
  %s5 = inlined_call_operand.vmem [shape: f32[5,1,128], index: 5, kind: input, shape index: {}]
  %s6 = inlined_call_operand.vmem [shape: f32[5,1,128], index: 6, kind: input, shape index: {}]
  %s7 = inlined_call_operand.vmem [shape: bf16[8,64], index: 7, kind: input, shape index: {}]
  %s8 = inlined_call_operand.vmem [shape: f32[8,128], index: 8, kind: output, shape index: {}]
  %s9 = sld [smem:[#allocation0]]
  $region42: #{gnn_msp_forward.1} parent=0
    _
  %s11 = ssub.s32 1, %s9
  %s12 = scalar_select 0, %s11, %s9
  // Predicated region
  $region2: #{gnn_msp_forward.1} parent=0 // pred_check
    _
  $region3: #{gnn_msp_forward.1} parent=0 // pred_check_branch
    %14 = sbr.rel (0) target = $region5
  $region4: #{gnn_msp_forward.1} parent=0 // pred_region
    _
  $region5: #{gnn_msp_forward.1} parent=0 // pred_fallthru
    _
  // Predicated region
  $region6: #{gnn_msp_forward.1} parent=0 // pred_check
    _
  $region7: #{gnn_msp_forward.1} parent=0 // pred_check_branch
    %16 = sbr.rel (0) target = $region9
  $region8: #{gnn_msp_forward.1} parent=0 // pred_region
    _
  $region9: #{gnn_msp_forward.1} parent=0 // pred_fallthru
    _
  // Predicated region
  $region10: #{gnn_msp_forward.1} parent=0 // pred_check
    _
  $region11: #{gnn_msp_forward.1} parent=0 // pred_check_branch
    %18 = sbr.rel (0) target = $region13
  $region12: #{gnn_msp_forward.1} parent=0 // pred_region
    _
  $region13: #{gnn_msp_forward.1} parent=0 // pred_fallthru
    _
  // Predicated region
  $region14: #{gnn_msp_forward.1} parent=0 // pred_check
    _
  $region15: #{gnn_msp_forward.1} parent=0 // pred_check_branch
    %20 = sbr.rel (0) target = $region17
  $region16: #{gnn_msp_forward.1} parent=0 // pred_region
    _
  $region17: #{gnn_msp_forward.1} parent=0 // pred_fallthru
    _
  // Predicated region
  $region18: #{gnn_msp_forward.1} parent=0 // pred_check
    _
  $region19: #{gnn_msp_forward.1} parent=0 // pred_check_branch
    %22 = sbr.rel (0) target = $region21
  $region20: #{gnn_msp_forward.1} parent=0 // pred_region
    _
  $region21: #{gnn_msp_forward.1} parent=0 // pred_fallthru
    _
  // Predicated region
  $region22: #{gnn_msp_forward.1} parent=0 // pred_check
    _
  $region23: #{gnn_msp_forward.1} parent=0 // pred_check_branch
    %24 = sbr.rel (0) target = $region25
  $region24: #{gnn_msp_forward.1} parent=0 // pred_region
    _
  $region25: #{gnn_msp_forward.1} parent=0 // pred_fallthru
    _
  // Predicated region
  $region26: #{gnn_msp_forward.1} parent=0 // pred_check
    _
  $region27: #{gnn_msp_forward.1} parent=0 // pred_check_branch
    %26 = sbr.rel (0) target = $region29
  $region28: #{gnn_msp_forward.1} parent=0 // pred_region
    _
  $region29: #{gnn_msp_forward.1} parent=0 // pred_fallthru
    _
  // Predicated region
  $region30: #{gnn_msp_forward.1} parent=0 // pred_check
    _
  $region31: #{gnn_msp_forward.1} parent=0 // pred_check_branch
    %28 = sbr.rel (0) target = $region33
  $region32: #{gnn_msp_forward.1} parent=0 // pred_region
    _
  $region33: #{gnn_msp_forward.1} parent=0 // pred_fallthru
    _
  %v30 = vld [vmem:[%s0] sm:$0xf]
  %v31 = vld [vmem:[%s0 + $0x4] sm:$0xf]
  %v32 = vld [vmem:[%s0 + $0x8] sm:$0xf]
  %v33 = vld [vmem:[%s0 + $0xc] sm:$0xf]
  %v34 = vld [vmem:[%s0 + $0x10] sm:$0xf]
  %v35 = vld [vmem:[%s0 + $0x14] sm:$0xf]
  %v36 = vld [vmem:[%s0 + $0x18] sm:$0xf]
  %v37 = vld [vmem:[%s0 + $0x1c] sm:$0xf]
  %v38 = vunpack.c.l.bf16 %v30
  %v39 = vunpack.c.l.bf16 %v31
  %v40 = vunpack.c.l.bf16 %v32
  %v41 = vunpack.c.l.bf16 %v33
  %v42 = vunpack.c.l.bf16 %v34
  %v43 = vunpack.c.l.bf16 %v35
  %v44 = vunpack.c.l.bf16 %v36
  %v45 = vunpack.c.l.bf16 %v37
  %v46 = vld [vmem:[%s1] sm:$0xff]
  %v47 = vld [vmem:[%s1 + $0x8] sm:$0xff]
  %v48 = vld [vmem:[%s1 + $0x10] sm:$0xff]
  %v49 = vld [vmem:[%s1 + $0x18] sm:$0xff]
  %v50 = vld [vmem:[%s1 + $0x20] sm:$0xff]
  %v51 = vld [vmem:[%s1 + $0x28] sm:$0xff]
  %v52 = vld [vmem:[%s1 + $0x30] sm:$0xff]
  %v53 = vld [vmem:[%s1 + $0x38] sm:$0xff]
  %55 = vset.pattern.permute.xlu0 0
  %56 = vperm.xlu0 %55, %v46
  %v57 = vpop.permute.xlu0 %56
  %60 = vset.pattern.permute.xlu0 0
  %61 = vperm.xlu0 %60, %v47
  %v62 = vpop.permute.xlu0 %61
  %65 = vset.pattern.permute.xlu0 0
  %66 = vperm.xlu0 %65, %v48
  %v67 = vpop.permute.xlu0 %66
  %70 = vset.pattern.permute.xlu0 0
  %71 = vperm.xlu0 %70, %v49
  %v72 = vpop.permute.xlu0 %71
  %75 = vset.pattern.permute.xlu0 0
  %76 = vperm.xlu0 %75, %v50
  %v77 = vpop.permute.xlu0 %76
  %80 = vset.pattern.permute.xlu0 0
  %81 = vperm.xlu0 %80, %v51
  %v82 = vpop.permute.xlu0 %81
  %85 = vset.pattern.permute.xlu0 0
  %86 = vperm.xlu0 %85, %v52
  %v87 = vpop.permute.xlu0 %86
  %90 = vset.pattern.permute.xlu0 0
  %91 = vperm.xlu0 %90, %v53
  %v92 = vpop.permute.xlu0 %91
  %v94 = vmul.f32 %v38, %v57
  %v95 = vmul.f32 %v39, %v62
  %v96 = vmul.f32 %v40, %v67
  %v97 = vmul.f32 %v41, %v72
  %v98 = vmul.f32 %v42, %v77
  %v99 = vmul.f32 %v43, %v82
  %v100 = vmul.f32 %v44, %v87
  %v101 = vmul.f32 %v45, %v92
  %v102 = vld [vmem:[%s2] sm:$0x1]
  %v104 = vlaneseq
  %v105 = vshrl.u32 %v104, 7
  %v106 = vsub.s32 0, %v105
  %v107 = vrot.slane %v102, %v106
  %v109 = vmul.f32 %v94, %v107
  %v110 = vmul.f32 %v95, %v107
  %v111 = vmul.f32 %v96, %v107
  %v112 = vmul.f32 %v97, %v107
  %v113 = vmul.f32 %v98, %v107
  %v114 = vmul.f32 %v99, %v107
  %v115 = vmul.f32 %v100, %v107
  %v116 = vmul.f32 %v101, %v107
  %v117 = vpack.c.bf16 %v110, %v109
  %v118 = vpack.c.bf16 %v112, %v111
  %v119 = vpack.c.bf16 %v114, %v113
  %v120 = vpack.c.bf16 %v116, %v115
  %v121 = vld [vmem:[%s3] sm:$0xff]
  %v122 = vld [vmem:[%s3 + $0x8] sm:$0xff]
  %v123 = vld [vmem:[%s3 + $0x10] sm:$0xff]
  %v124 = vld [vmem:[%s3 + $0x18] sm:$0xff]
  %v125 = vld [vmem:[%s3 + $0x20] sm:$0xff]
  %v126 = vld [vmem:[%s3 + $0x28] sm:$0xff]
  %v127 = vld [vmem:[%s3 + $0x30] sm:$0xff]
  %v128 = vld [vmem:[%s3 + $0x38] sm:$0xff]
  %v129 = vpack.c.bf16 %v122, %v121
  %v130 = vpack.c.bf16 %v124, %v123
  %v131 = vpack.c.bf16 %v126, %v125
  %v132 = vpack.c.bf16 %v128, %v127
  %v133 = vld [vmem:[%s4] sm:$0xf]
  %v134 = vld [vmem:[%s4 + $0x4] sm:$0xf]
  %v135 = vld [vmem:[%s4 + $0x8] sm:$0xf]
  %v136 = vld [vmem:[%s4 + $0xc] sm:$0xf]
  %v137 = vld [vmem:[%s4 + $0x10] sm:$0xf]
  %v138 = vld [vmem:[%s4 + $0x14] sm:$0xf]
  %v139 = vld [vmem:[%s4 + $0x18] sm:$0xf]
  %v140 = vld [vmem:[%s4 + $0x1c] sm:$0xf]
  %v141 = vld [vmem:[%s4 + $0x20] sm:$0xf]
  %v142 = vld [vmem:[%s4 + $0x24] sm:$0xf]
  %v143 = vld [vmem:[%s4 + $0x28] sm:$0xf]
  %v144 = vld [vmem:[%s4 + $0x2c] sm:$0xf]
  %v145 = vld [vmem:[%s4 + $0x30] sm:$0xf]
  %v146 = vld [vmem:[%s4 + $0x34] sm:$0xf]
  %v147 = vld [vmem:[%s4 + $0x38] sm:$0xf]
  %v148 = vld [vmem:[%s4 + $0x3c] sm:$0xf]
  %v165 = vunpack.c.l.b16 %v133
  %v166 = vunpack.c.l.b16 %v134
  %v167 = vunpack.c.l.b16 %v135
  %v168 = vunpack.c.l.b16 %v136
  %v169 = vunpack.c.l.b16 %v137
  %v170 = vunpack.c.l.b16 %v138
  %v171 = vunpack.c.l.b16 %v139
  %v172 = vunpack.c.l.b16 %v140
  %v173 = vunpack.c.l.b16 %v141
  %v174 = vunpack.c.l.b16 %v142
  %v175 = vunpack.c.l.b16 %v143
  %v176 = vunpack.c.l.b16 %v144
  %v177 = vunpack.c.l.b16 %v145
  %v178 = vunpack.c.l.b16 %v146
  %v179 = vunpack.c.l.b16 %v147
  %v180 = vunpack.c.l.b16 %v148
  %v181 = vpack.c.b16 %v166, %v165
  %v182 = vpack.c.b16 %v168, %v167
  %v183 = vpack.c.b16 %v170, %v169
  %v184 = vpack.c.b16 %v172, %v171
  %v185 = vpack.c.b16 %v174, %v173
  %v186 = vpack.c.b16 %v176, %v175
  %v187 = vpack.c.b16 %v178, %v177
  %v188 = vpack.c.b16 %v180, %v179
  %197 = vmatprep.subr.bf16.mxu0 0
  %198 = vmatpush1.bf16.msra.mxu0 %v181
  %199 = vmatprep.subr.bf16.mxu0 0
  %200 = vmatpush1.bf16.msra.mxu0 %v182
  %201 = vmatprep.subr.bf16.mxu0 0
  %202 = vmatpush1.bf16.msra.mxu0 %v183
  %203 = vmatprep.subr.bf16.mxu0 0
  %204 = vmatpush1.bf16.msra.mxu0 %v184
  %205 = vmatprep.subr.bf16.mxu0 0
  %206 = vmatpush1.bf16.msra.mxu0 %v185
  %207 = vmatprep.subr.bf16.mxu0 0
  %208 = vmatpush1.bf16.msra.mxu0 %v186
  %209 = vmatprep.subr.bf16.mxu0 0
  %210 = vmatpush1.bf16.msra.mxu0 %v187
  %211 = vmatprep.subr.bf16.mxu0 0
  %212 = vmatpush1.bf16.msra.mxu0 %v188
  %213 = vmatprep.subr.bf16.mxu0 0
  %214 = vmatpush1.bf16.msra.mxu0 0
  %215 = vmatprep.subr.bf16.mxu0 0
  %216 = vmatpush1.bf16.msra.mxu0 0
  %217 = vmatprep.subr.bf16.mxu0 0
  %218 = vmatpush1.bf16.msra.mxu0 0
  %219 = vmatprep.subr.bf16.mxu0 0
  %220 = vmatpush1.bf16.msra.mxu0 0
  %221 = vmatprep.subr.bf16.mxu0 0
  %222 = vmatpush1.bf16.msra.mxu0 0
  %223 = vmatprep.subr.bf16.mxu0 0
  %224 = vmatpush1.bf16.msra.mxu0 0
  %225 = vmatprep.subr.bf16.mxu0 0
  %226 = vmatpush1.bf16.msra.mxu0 0
  %227 = vmatprep.subr.bf16.mxu0 0
  %228 = vmatpush1.bf16.msra.mxu0 0
  %229 = vmatprep.mubr.bf16.mxu0 0
  %230 = vmatmul.mubr.bf16.gmra.mrb[0].mxu0 %v129
  %v231 = vpop.f32.mrb[0].mxu0
  %v232 = vadd.f32 0.0, %v231
  %v233 = vpop.f32.mrb[0].mxu0
  %v234 = vpop.f32.mrb[0].mxu0
  %v235 = vadd.f32 0.0, %v234
  %v236 = vpop.f32.mrb[0].mxu0
  %237 = vmatprep.mubr.bf16.mxu0 0
  %238 = vmatmul.mubr.bf16.gmra.mrb[0].mxu0 %v130
  %v239 = vpop.f32.mrb[0].mxu0
  %v240 = vadd.f32 0.0, %v239
  %v241 = vpop.f32.mrb[0].mxu0
  %v242 = vpop.f32.mrb[0].mxu0
  %v243 = vadd.f32 0.0, %v242
  %v244 = vpop.f32.mrb[0].mxu0
  %245 = vmatprep.mubr.bf16.mxu0 0
  %246 = vmatmul.mubr.bf16.gmra.mrb[0].mxu0 %v131
  %v247 = vpop.f32.mrb[0].mxu0
  %v248 = vadd.f32 0.0, %v247
  %v249 = vpop.f32.mrb[0].mxu0
  %v250 = vpop.f32.mrb[0].mxu0
  %v251 = vadd.f32 0.0, %v250
  %v252 = vpop.f32.mrb[0].mxu0
  %253 = vmatprep.mubr.bf16.mxu0 0
  %254 = vmatmul.mubr.bf16.gmra.mrb[0].mxu0 %v132
  %v255 = vpop.f32.mrb[0].mxu0
  %v256 = vadd.f32 0.0, %v255
  %v257 = vpop.f32.mrb[0].mxu0
  %v258 = vpop.f32.mrb[0].mxu0
  %v259 = vadd.f32 0.0, %v258
  %v260 = vpop.f32.mrb[0].mxu0
  %261 = vdwg.mxu0
  %v262 = vpack.c.bf16 %v235, %v232
  %v263 = vpack.c.bf16 %v243, %v240
  %v264 = vpack.c.bf16 %v251, %v248
  %v265 = vpack.c.bf16 %v259, %v256
  %vm266 = vcmask 523264
  %v268 = vsel %vm266, %v117, 0
  %v271 = vsel %vm266, %v118, 0
  %v274 = vsel %vm266, %v119, 0
  %v277 = vsel %vm266, %v120, 0
  %279 = vmatprep.subr.bf16.mxu0 0
  %280 = vmatpush1.bf16.msra.mxu0 %v262
  %281 = vmatprep.subr.bf16.mxu0 0
  %282 = vmatpush1.bf16.msra.mxu0 %v263
  %283 = vmatprep.subr.bf16.mxu0 0
  %284 = vmatpush1.bf16.msra.mxu0 %v264
  %285 = vmatprep.subr.bf16.mxu0 0
  %286 = vmatpush1.bf16.msra.mxu0 %v265
  %287 = vmatprep.subr.bf16.mxu0 0
  %288 = vmatpush1.bf16.msra.mxu0 0
  %289 = vmatprep.subr.bf16.mxu0 0
  %290 = vmatpush1.bf16.msra.mxu0 0
  %291 = vmatprep.subr.bf16.mxu0 0
  %292 = vmatpush1.bf16.msra.mxu0 0
  %293 = vmatprep.subr.bf16.mxu0 0
  %294 = vmatpush1.bf16.msra.mxu0 0
  %295 = vmatprep.subr.bf16.mxu0 0
  %296 = vmatpush1.bf16.msra.mxu0 0
  %297 = vmatprep.subr.bf16.mxu0 0
  %298 = vmatpush1.bf16.msra.mxu0 0
  %299 = vmatprep.subr.bf16.mxu0 0
  %300 = vmatpush1.bf16.msra.mxu0 0
  %301 = vmatprep.subr.bf16.mxu0 0
  %302 = vmatpush1.bf16.msra.mxu0 0
  %303 = vmatprep.subr.bf16.mxu0 0
  %304 = vmatpush1.bf16.msra.mxu0 0
  %305 = vmatprep.subr.bf16.mxu0 0
  %306 = vmatpush1.bf16.msra.mxu0 0
  %307 = vmatprep.subr.bf16.mxu0 0
  %308 = vmatpush1.bf16.msra.mxu0 0
  %309 = vmatprep.subr.bf16.mxu0 0
  %310 = vmatpush1.bf16.msra.mxu0 0
  %311 = vmatprep.mubr.bf16.mxu0 0
  %312 = vmatmul.mubr.bf16.gmra.mrb[0].mxu0 %v268
  %v313 = vpop.f32.mrb[0].mxu0
  %v314 = vadd.f32 0.0, %v313
  %v315 = vpop.f32.mrb[0].mxu0
  %v316 = vpop.f32.mrb[0].mxu0
  %v317 = vadd.f32 0.0, %v316
  %v318 = vpop.f32.mrb[0].mxu0
  %319 = vmatprep.mubr.bf16.mxu0 0
  %320 = vmatmul.mubr.bf16.gmra.mrb[0].mxu0 %v271
  %v321 = vpop.f32.mrb[0].mxu0
  %v322 = vadd.f32 0.0, %v321
  %v323 = vpop.f32.mrb[0].mxu0
  %v324 = vpop.f32.mrb[0].mxu0
  %v325 = vadd.f32 0.0, %v324
  %v326 = vpop.f32.mrb[0].mxu0
  %327 = vmatprep.mubr.bf16.mxu0 0
  %328 = vmatmul.mubr.bf16.gmra.mrb[0].mxu0 %v274
  %v329 = vpop.f32.mrb[0].mxu0
  %v330 = vadd.f32 0.0, %v329
  %v331 = vpop.f32.mrb[0].mxu0
  %v332 = vpop.f32.mrb[0].mxu0
  %v333 = vadd.f32 0.0, %v332
  %v334 = vpop.f32.mrb[0].mxu0
  %335 = vmatprep.mubr.bf16.mxu0 0
  %336 = vmatmul.mubr.bf16.gmra.mrb[0].mxu0 %v277
  %v337 = vpop.f32.mrb[0].mxu0
  %v338 = vadd.f32 0.0, %v337
  %v339 = vpop.f32.mrb[0].mxu0
  %v340 = vpop.f32.mrb[0].mxu0
  %v341 = vadd.f32 0.0, %v340
  %v342 = vpop.f32.mrb[0].mxu0
  %343 = vdwg.mxu0
  %v344 = vadd.f32 %v314, %v317
  %v345 = vadd.f32 %v344, %v322
  %v346 = vadd.f32 %v345, %v325
  %v347 = vadd.f32 %v346, %v330
  %v348 = vadd.f32 %v347, %v333
  %v349 = vadd.f32 %v348, %v338
  %v350 = vadd.f32 %v349, %v341
  %v351 = vrot.slane %v350, 4
  %v352 = vadd.f32 %v350, %v351
  %v353 = vrot.slane %v352, 2
  %v354 = vadd.f32 %v352, %v353
  %v355 = vrot.slane %v354, 1
  %v356 = vadd.f32 %v354, %v355
  %v357 = vmul.f32 %v314, %v314
  %v358 = vmul.f32 %v317, %v317
  %v359 = vmul.f32 %v322, %v322
  %v360 = vmul.f32 %v325, %v325
  %v361 = vmul.f32 %v330, %v330
  %v362 = vmul.f32 %v333, %v333
  %v363 = vmul.f32 %v338, %v338
  %v364 = vmul.f32 %v341, %v341
  %v365 = vadd.f32 %v357, %v358
  %v366 = vadd.f32 %v365, %v359
  %v367 = vadd.f32 %v366, %v360
  %v368 = vadd.f32 %v367, %v361
  %v369 = vadd.f32 %v368, %v362
  %v370 = vadd.f32 %v369, %v363
  %v371 = vadd.f32 %v370, %v364
  %v372 = vrot.slane %v371, 4
  %v373 = vadd.f32 %v371, %v372
  %v374 = vrot.slane %v373, 2
  %v375 = vadd.f32 %v373, %v374
  %v376 = vrot.slane %v375, 1
  %v377 = vadd.f32 %v375, %v376
  %v378 = vmul.f32 %v356, 0.015625
  %v379 = vmul.f32 %v377, 0.015625
  %v380 = vmul.f32 %v378, %v378
  %v381 = vsub.f32 %v379, %v380
  %v382 = vmax.f32 %v381, 0.0
  %v383 = vld [vmem:[%s5] sm:$0x1]
  %v384 = vadd.f32 %v382, 1e-05
  %v385 = vrsqrt.pop %v384
  %v386 = vmul.f32 %v383, %v385
  %v387 = vld [vmem:[%s6] sm:$0x1]
  %v388 = vmul.f32 %v378, %v386
  %v389 = vsub.f32 %v387, %v388
  %v391 = vlaneseq
  %v392 = vshrl.u32 %v391, 7
  %v393 = vsub.s32 0, %v392
  %v394 = vrot.slane %v386, %v393
  %v396 = vmul.f32 %v314, %v394
  %v397 = vmul.f32 %v317, %v394
  %v398 = vmul.f32 %v322, %v394
  %v399 = vmul.f32 %v325, %v394
  %v400 = vmul.f32 %v330, %v394
  %v401 = vmul.f32 %v333, %v394
  %v402 = vmul.f32 %v338, %v394
  %v403 = vmul.f32 %v341, %v394
  %v405 = vlaneseq
  %v406 = vshrl.u32 %v405, 7
  %v407 = vsub.s32 0, %v406
  %v408 = vrot.slane %v389, %v407
  %v410 = vadd.f32 %v396, %v408
  %v411 = vadd.f32 %v397, %v408
  %v412 = vadd.f32 %v398, %v408
  %v413 = vadd.f32 %v399, %v408
  %v414 = vadd.f32 %v400, %v408
  %v415 = vadd.f32 %v401, %v408
  %v416 = vadd.f32 %v402, %v408
  %v417 = vadd.f32 %v403, %v408
  %v418 = vmax.f32 %v410, 0.0
  %v419 = vmax.f32 %v411, 0.0
  %v420 = vmax.f32 %v412, 0.0
  %v421 = vmax.f32 %v413, 0.0
  %v422 = vmax.f32 %v414, 0.0
  %v423 = vmax.f32 %v415, 0.0
  %v424 = vmax.f32 %v416, 0.0
  %v425 = vmax.f32 %v417, 0.0
  %v426 = vpack.c.bf16 %v419, %v418
  %v427 = vpack.c.bf16 %v421, %v420
  %v428 = vpack.c.bf16 %v423, %v422
  %v429 = vpack.c.bf16 %v425, %v424
  %s430 = scalar_lea.vmem %s4, 64
  %v431 = vld [vmem:[%s430] sm:$0xf]
  %v432 = vld [vmem:[%s430 + $0x4] sm:$0xf]
  %v433 = vld [vmem:[%s430 + $0x8] sm:$0xf]
  %v434 = vld [vmem:[%s430 + $0xc] sm:$0xf]
  %v435 = vld [vmem:[%s430 + $0x10] sm:$0xf]
  %v436 = vld [vmem:[%s430 + $0x14] sm:$0xf]
  %v437 = vld [vmem:[%s430 + $0x18] sm:$0xf]
  %v438 = vld [vmem:[%s430 + $0x1c] sm:$0xf]
  %v439 = vld [vmem:[%s430 + $0x20] sm:$0xf]
  %v440 = vld [vmem:[%s430 + $0x24] sm:$0xf]
  %v441 = vld [vmem:[%s430 + $0x28] sm:$0xf]
  %v442 = vld [vmem:[%s430 + $0x2c] sm:$0xf]
  %v443 = vld [vmem:[%s430 + $0x30] sm:$0xf]
  %v444 = vld [vmem:[%s430 + $0x34] sm:$0xf]
  %v445 = vld [vmem:[%s430 + $0x38] sm:$0xf]
  %v446 = vld [vmem:[%s430 + $0x3c] sm:$0xf]
  %v463 = vunpack.c.l.b16 %v431
  %v464 = vunpack.c.l.b16 %v432
  %v465 = vunpack.c.l.b16 %v433
  %v466 = vunpack.c.l.b16 %v434
  %v467 = vunpack.c.l.b16 %v435
  %v468 = vunpack.c.l.b16 %v436
  %v469 = vunpack.c.l.b16 %v437
  %v470 = vunpack.c.l.b16 %v438
  %v471 = vunpack.c.l.b16 %v439
  %v472 = vunpack.c.l.b16 %v440
  %v473 = vunpack.c.l.b16 %v441
  %v474 = vunpack.c.l.b16 %v442
  %v475 = vunpack.c.l.b16 %v443
  %v476 = vunpack.c.l.b16 %v444
  %v477 = vunpack.c.l.b16 %v445
  %v478 = vunpack.c.l.b16 %v446
  %v479 = vpack.c.b16 %v464, %v463
  %v480 = vpack.c.b16 %v466, %v465
  %v481 = vpack.c.b16 %v468, %v467
  %v482 = vpack.c.b16 %v470, %v469
  %v483 = vpack.c.b16 %v472, %v471
  %v484 = vpack.c.b16 %v474, %v473
  %v485 = vpack.c.b16 %v476, %v475
  %v486 = vpack.c.b16 %v478, %v477
  %495 = vmatprep.subr.bf16.mxu0 0
  %496 = vmatpush1.bf16.msra.mxu0 %v479
  %497 = vmatprep.subr.bf16.mxu0 0
  %498 = vmatpush1.bf16.msra.mxu0 %v480
  %499 = vmatprep.subr.bf16.mxu0 0
  %500 = vmatpush1.bf16.msra.mxu0 %v481
  %501 = vmatprep.subr.bf16.mxu0 0
  %502 = vmatpush1.bf16.msra.mxu0 %v482
  %503 = vmatprep.subr.bf16.mxu0 0
  %504 = vmatpush1.bf16.msra.mxu0 %v483
  %505 = vmatprep.subr.bf16.mxu0 0
  %506 = vmatpush1.bf16.msra.mxu0 %v484
  %507 = vmatprep.subr.bf16.mxu0 0
  %508 = vmatpush1.bf16.msra.mxu0 %v485
  %509 = vmatprep.subr.bf16.mxu0 0
  %510 = vmatpush1.bf16.msra.mxu0 %v486
  %511 = vmatprep.subr.bf16.mxu0 0
  %512 = vmatpush1.bf16.msra.mxu0 0
  %513 = vmatprep.subr.bf16.mxu0 0
  %514 = vmatpush1.bf16.msra.mxu0 0
  %515 = vmatprep.subr.bf16.mxu0 0
  %516 = vmatpush1.bf16.msra.mxu0 0
  %517 = vmatprep.subr.bf16.mxu0 0
  %518 = vmatpush1.bf16.msra.mxu0 0
  %519 = vmatprep.subr.bf16.mxu0 0
  %520 = vmatpush1.bf16.msra.mxu0 0
  %521 = vmatprep.subr.bf16.mxu0 0
  %522 = vmatpush1.bf16.msra.mxu0 0
  %523 = vmatprep.subr.bf16.mxu0 0
  %524 = vmatpush1.bf16.msra.mxu0 0
  %525 = vmatprep.subr.bf16.mxu0 0
  %526 = vmatpush1.bf16.msra.mxu0 0
  %527 = vmatprep.mubr.bf16.mxu0 0
  %528 = vmatmul.mubr.bf16.gmra.mrb[0].mxu0 %v426
  %v529 = vpop.f32.mrb[0].mxu0
  %v530 = vadd.f32 0.0, %v529
  %v531 = vpop.f32.mrb[0].mxu0
  %v532 = vpop.f32.mrb[0].mxu0
  %v533 = vadd.f32 0.0, %v532
  %v534 = vpop.f32.mrb[0].mxu0
  %535 = vmatprep.mubr.bf16.mxu0 0
  %536 = vmatmul.mubr.bf16.gmra.mrb[0].mxu0 %v427
  %v537 = vpop.f32.mrb[0].mxu0
  %v538 = vadd.f32 0.0, %v537
  %v539 = vpop.f32.mrb[0].mxu0
  %v540 = vpop.f32.mrb[0].mxu0
  %v541 = vadd.f32 0.0, %v540
  %v542 = vpop.f32.mrb[0].mxu0
  %543 = vmatprep.mubr.bf16.mxu0 0
  %544 = vmatmul.mubr.bf16.gmra.mrb[0].mxu0 %v428
  %v545 = vpop.f32.mrb[0].mxu0
  %v546 = vadd.f32 0.0, %v545
  %v547 = vpop.f32.mrb[0].mxu0
  %v548 = vpop.f32.mrb[0].mxu0
  %v549 = vadd.f32 0.0, %v548
  %v550 = vpop.f32.mrb[0].mxu0
  %551 = vmatprep.mubr.bf16.mxu0 0
  %552 = vmatmul.mubr.bf16.gmra.mrb[0].mxu0 %v429
  %v553 = vpop.f32.mrb[0].mxu0
  %v554 = vadd.f32 0.0, %v553
  %v555 = vpop.f32.mrb[0].mxu0
  %v556 = vpop.f32.mrb[0].mxu0
  %v557 = vadd.f32 0.0, %v556
  %v558 = vpop.f32.mrb[0].mxu0
  %559 = vdwg.mxu0
  %v560 = vpack.c.bf16 %v533, %v530
  %v561 = vpack.c.bf16 %v541, %v538
  %v562 = vpack.c.bf16 %v549, %v546
  %v563 = vpack.c.bf16 %v557, %v554
  %564 = vmatprep.subr.bf16.mxu0 0
  %565 = vmatpush1.bf16.msra.mxu0 %v560
  %566 = vmatprep.subr.bf16.mxu0 0
  %567 = vmatpush1.bf16.msra.mxu0 %v561
  %568 = vmatprep.subr.bf16.mxu0 0
  %569 = vmatpush1.bf16.msra.mxu0 %v562
  %570 = vmatprep.subr.bf16.mxu0 0
  %571 = vmatpush1.bf16.msra.mxu0 %v563
  %572 = vmatprep.subr.bf16.mxu0 0
  %573 = vmatpush1.bf16.msra.mxu0 0
  %574 = vmatprep.subr.bf16.mxu0 0
  %575 = vmatpush1.bf16.msra.mxu0 0
  %576 = vmatprep.subr.bf16.mxu0 0
  %577 = vmatpush1.bf16.msra.mxu0 0
  %578 = vmatprep.subr.bf16.mxu0 0
  %579 = vmatpush1.bf16.msra.mxu0 0
  %580 = vmatprep.subr.bf16.mxu0 0
  %581 = vmatpush1.bf16.msra.mxu0 0
  %582 = vmatprep.subr.bf16.mxu0 0
  %583 = vmatpush1.bf16.msra.mxu0 0
  %584 = vmatprep.subr.bf16.mxu0 0
  %585 = vmatpush1.bf16.msra.mxu0 0
  %586 = vmatprep.subr.bf16.mxu0 0
  %587 = vmatpush1.bf16.msra.mxu0 0
  %588 = vmatprep.subr.bf16.mxu0 0
  %589 = vmatpush1.bf16.msra.mxu0 0
  %590 = vmatprep.subr.bf16.mxu0 0
  %591 = vmatpush1.bf16.msra.mxu0 0
  %592 = vmatprep.subr.bf16.mxu0 0
  %593 = vmatpush1.bf16.msra.mxu0 0
  %594 = vmatprep.subr.bf16.mxu0 0
  %595 = vmatpush1.bf16.msra.mxu0 0
  %596 = vmatprep.mubr.bf16.mxu0 0
  %597 = vmatmul.mubr.bf16.gmra.mrb[0].mxu0 %v268
  %v598 = vpop.f32.mrb[0].mxu0
  %v599 = vadd.f32 0.0, %v598
  %v600 = vpop.f32.mrb[0].mxu0
  %v601 = vpop.f32.mrb[0].mxu0
  %v602 = vadd.f32 0.0, %v601
  %v603 = vpop.f32.mrb[0].mxu0
  %604 = vmatprep.mubr.bf16.mxu0 0
  %605 = vmatmul.mubr.bf16.gmra.mrb[0].mxu0 %v271
  %v606 = vpop.f32.mrb[0].mxu0
  %v607 = vadd.f32 0.0, %v606
  %v608 = vpop.f32.mrb[0].mxu0
  %v609 = vpop.f32.mrb[0].mxu0
  %v610 = vadd.f32 0.0, %v609
  %v611 = vpop.f32.mrb[0].mxu0
  %612 = vmatprep.mubr.bf16.mxu0 0
  %613 = vmatmul.mubr.bf16.gmra.mrb[0].mxu0 %v274
  %v614 = vpop.f32.mrb[0].mxu0
  %v615 = vadd.f32 0.0, %v614
  %v616 = vpop.f32.mrb[0].mxu0
  %v617 = vpop.f32.mrb[0].mxu0
  %v618 = vadd.f32 0.0, %v617
  %v619 = vpop.f32.mrb[0].mxu0
  %620 = vmatprep.mubr.bf16.mxu0 0
  %621 = vmatmul.mubr.bf16.gmra.mrb[0].mxu0 %v277
  %v622 = vpop.f32.mrb[0].mxu0
  %v623 = vadd.f32 0.0, %v622
  %v624 = vpop.f32.mrb[0].mxu0
  %v625 = vpop.f32.mrb[0].mxu0
  %v626 = vadd.f32 0.0, %v625
  %v627 = vpop.f32.mrb[0].mxu0
  %628 = vdwg.mxu0
  %v629 = vadd.f32 %v599, %v602
  %v630 = vadd.f32 %v629, %v607
  %v631 = vadd.f32 %v630, %v610
  %v632 = vadd.f32 %v631, %v615
  %v633 = vadd.f32 %v632, %v618
  %v634 = vadd.f32 %v633, %v623
  %v635 = vadd.f32 %v634, %v626
  %v636 = vrot.slane %v635, 4
  %v637 = vadd.f32 %v635, %v636
  %v638 = vrot.slane %v637, 2
  %v639 = vadd.f32 %v637, %v638
  %v640 = vrot.slane %v639, 1
  %v641 = vadd.f32 %v639, %v640
  %v642 = vmul.f32 %v599, %v599
  %v643 = vmul.f32 %v602, %v602
  %v644 = vmul.f32 %v607, %v607
  %v645 = vmul.f32 %v610, %v610
  %v646 = vmul.f32 %v615, %v615
  %v647 = vmul.f32 %v618, %v618
  %v648 = vmul.f32 %v623, %v623
  %v649 = vmul.f32 %v626, %v626
  %v650 = vadd.f32 %v642, %v643
  %v651 = vadd.f32 %v650, %v644
  %v652 = vadd.f32 %v651, %v645
  %v653 = vadd.f32 %v652, %v646
  %v654 = vadd.f32 %v653, %v647
  %v655 = vadd.f32 %v654, %v648
  %v656 = vadd.f32 %v655, %v649
  %v657 = vrot.slane %v656, 4
  %v658 = vadd.f32 %v656, %v657
  %v659 = vrot.slane %v658, 2
  %v660 = vadd.f32 %v658, %v659
  %v661 = vrot.slane %v660, 1
  %v662 = vadd.f32 %v660, %v661
  %v663 = vmul.f32 %v641, 0.015625
  %v664 = vmul.f32 %v662, 0.015625
  %v665 = vmul.f32 %v663, %v663
  %v666 = vsub.f32 %v664, %v665
  %v667 = vmax.f32 %v666, 0.0
  %s668 = scalar_lea.vmem %s5, 1
  %v669 = vld [vmem:[%s668] sm:$0x1]
  %v670 = vadd.f32 %v667, 1e-05
  %v671 = vrsqrt.pop %v670
  %v672 = vmul.f32 %v669, %v671
  %s673 = scalar_lea.vmem %s6, 1
  %v674 = vld [vmem:[%s673] sm:$0x1]
  %v675 = vmul.f32 %v663, %v672
  %v676 = vsub.f32 %v674, %v675
  %v678 = vlaneseq
  %v679 = vshrl.u32 %v678, 7
  %v680 = vsub.s32 0, %v679
  %v681 = vrot.slane %v672, %v680
  %v683 = vmul.f32 %v599, %v681
  %v684 = vmul.f32 %v602, %v681
  %v685 = vmul.f32 %v607, %v681
  %v686 = vmul.f32 %v610, %v681
  %v687 = vmul.f32 %v615, %v681
  %v688 = vmul.f32 %v618, %v681
  %v689 = vmul.f32 %v623, %v681
  %v690 = vmul.f32 %v626, %v681
  %v692 = vlaneseq
  %v693 = vshrl.u32 %v692, 7
  %v694 = vsub.s32 0, %v693
  %v695 = vrot.slane %v676, %v694
  %v697 = vadd.f32 %v683, %v695
  %v698 = vadd.f32 %v684, %v695
  %v699 = vadd.f32 %v685, %v695
  %v700 = vadd.f32 %v686, %v695
  %v701 = vadd.f32 %v687, %v695
  %v702 = vadd.f32 %v688, %v695
  %v703 = vadd.f32 %v689, %v695
  %v704 = vadd.f32 %v690, %v695
  %v705 = vmax.f32 %v697, 0.0
  %v706 = vmax.f32 %v698, 0.0
  %v707 = vmax.f32 %v699, 0.0
  %v708 = vmax.f32 %v700, 0.0
  %v709 = vmax.f32 %v701, 0.0
  %v710 = vmax.f32 %v702, 0.0
  %v711 = vmax.f32 %v703, 0.0
  %v712 = vmax.f32 %v704, 0.0
  %v713 = vpack.c.bf16 %v706, %v705
  %v714 = vpack.c.bf16 %v708, %v707
  %v715 = vpack.c.bf16 %v710, %v709
  %v716 = vpack.c.bf16 %v712, %v711
  %s717 = scalar_lea.vmem %s4, 128
  %v718 = vld [vmem:[%s717] sm:$0xf]
  %v719 = vld [vmem:[%s717 + $0x4] sm:$0xf]
  %v720 = vld [vmem:[%s717 + $0x8] sm:$0xf]
  %v721 = vld [vmem:[%s717 + $0xc] sm:$0xf]
  %v722 = vld [vmem:[%s717 + $0x10] sm:$0xf]
  %v723 = vld [vmem:[%s717 + $0x14] sm:$0xf]
  %v724 = vld [vmem:[%s717 + $0x18] sm:$0xf]
  %v725 = vld [vmem:[%s717 + $0x1c] sm:$0xf]
  %v726 = vld [vmem:[%s717 + $0x20] sm:$0xf]
  %v727 = vld [vmem:[%s717 + $0x24] sm:$0xf]
  %v728 = vld [vmem:[%s717 + $0x28] sm:$0xf]
  %v729 = vld [vmem:[%s717 + $0x2c] sm:$0xf]
  %v730 = vld [vmem:[%s717 + $0x30] sm:$0xf]
  %v731 = vld [vmem:[%s717 + $0x34] sm:$0xf]
  %v732 = vld [vmem:[%s717 + $0x38] sm:$0xf]
  %v733 = vld [vmem:[%s717 + $0x3c] sm:$0xf]
  %v750 = vunpack.c.l.b16 %v718
  %v751 = vunpack.c.l.b16 %v719
  %v752 = vunpack.c.l.b16 %v720
  %v753 = vunpack.c.l.b16 %v721
  %v754 = vunpack.c.l.b16 %v722
  %v755 = vunpack.c.l.b16 %v723
  %v756 = vunpack.c.l.b16 %v724
  %v757 = vunpack.c.l.b16 %v725
  %v758 = vunpack.c.l.b16 %v726
  %v759 = vunpack.c.l.b16 %v727
  %v760 = vunpack.c.l.b16 %v728
  %v761 = vunpack.c.l.b16 %v729
  %v762 = vunpack.c.l.b16 %v730
  %v763 = vunpack.c.l.b16 %v731
  %v764 = vunpack.c.l.b16 %v732
  %v765 = vunpack.c.l.b16 %v733
  %v766 = vpack.c.b16 %v751, %v750
  %v767 = vpack.c.b16 %v753, %v752
  %v768 = vpack.c.b16 %v755, %v754
  %v769 = vpack.c.b16 %v757, %v756
  %v770 = vpack.c.b16 %v759, %v758
  %v771 = vpack.c.b16 %v761, %v760
  %v772 = vpack.c.b16 %v763, %v762
  %v773 = vpack.c.b16 %v765, %v764
  %782 = vmatprep.subr.bf16.mxu0 0
  %783 = vmatpush1.bf16.msra.mxu0 %v766
  %784 = vmatprep.subr.bf16.mxu0 0
  %785 = vmatpush1.bf16.msra.mxu0 %v767
  %786 = vmatprep.subr.bf16.mxu0 0
  %787 = vmatpush1.bf16.msra.mxu0 %v768
  %788 = vmatprep.subr.bf16.mxu0 0
  %789 = vmatpush1.bf16.msra.mxu0 %v769
  %790 = vmatprep.subr.bf16.mxu0 0
  %791 = vmatpush1.bf16.msra.mxu0 %v770
  %792 = vmatprep.subr.bf16.mxu0 0
  %793 = vmatpush1.bf16.msra.mxu0 %v771
  %794 = vmatprep.subr.bf16.mxu0 0
  %795 = vmatpush1.bf16.msra.mxu0 %v772
  %796 = vmatprep.subr.bf16.mxu0 0
  %797 = vmatpush1.bf16.msra.mxu0 %v773
  %798 = vmatprep.subr.bf16.mxu0 0
  %799 = vmatpush1.bf16.msra.mxu0 0
  %800 = vmatprep.subr.bf16.mxu0 0
  %801 = vmatpush1.bf16.msra.mxu0 0
  %802 = vmatprep.subr.bf16.mxu0 0
  %803 = vmatpush1.bf16.msra.mxu0 0
  %804 = vmatprep.subr.bf16.mxu0 0
  %805 = vmatpush1.bf16.msra.mxu0 0
  %806 = vmatprep.subr.bf16.mxu0 0
  %807 = vmatpush1.bf16.msra.mxu0 0
  %808 = vmatprep.subr.bf16.mxu0 0
  %809 = vmatpush1.bf16.msra.mxu0 0
  %810 = vmatprep.subr.bf16.mxu0 0
  %811 = vmatpush1.bf16.msra.mxu0 0
  %812 = vmatprep.subr.bf16.mxu0 0
  %813 = vmatpush1.bf16.msra.mxu0 0
  %814 = vmatprep.mubr.bf16.mxu0 0
  %815 = vmatmul.mubr.bf16.gmra.mrb[0].mxu0 %v713
  %v816 = vpop.f32.mrb[0].mxu0
  %v817 = vadd.f32 0.0, %v816
  %v818 = vpop.f32.mrb[0].mxu0
  %v819 = vpop.f32.mrb[0].mxu0
  %v820 = vadd.f32 0.0, %v819
  %v821 = vpop.f32.mrb[0].mxu0
  %822 = vmatprep.mubr.bf16.mxu0 0
  %823 = vmatmul.mubr.bf16.gmra.mrb[0].mxu0 %v714
  %v824 = vpop.f32.mrb[0].mxu0
  %v825 = vadd.f32 0.0, %v824
  %v826 = vpop.f32.mrb[0].mxu0
  %v827 = vpop.f32.mrb[0].mxu0
  %v828 = vadd.f32 0.0, %v827
  %v829 = vpop.f32.mrb[0].mxu0
  %830 = vmatprep.mubr.bf16.mxu0 0
  %831 = vmatmul.mubr.bf16.gmra.mrb[0].mxu0 %v715
  %v832 = vpop.f32.mrb[0].mxu0
  %v833 = vadd.f32 0.0, %v832
  %v834 = vpop.f32.mrb[0].mxu0
  %v835 = vpop.f32.mrb[0].mxu0
  %v836 = vadd.f32 0.0, %v835
  %v837 = vpop.f32.mrb[0].mxu0
  %838 = vmatprep.mubr.bf16.mxu0 0
  %839 = vmatmul.mubr.bf16.gmra.mrb[0].mxu0 %v716
  %v840 = vpop.f32.mrb[0].mxu0
  %v841 = vadd.f32 0.0, %v840
  %v842 = vpop.f32.mrb[0].mxu0
  %v843 = vpop.f32.mrb[0].mxu0
  %v844 = vadd.f32 0.0, %v843
  %v845 = vpop.f32.mrb[0].mxu0
  %846 = vdwg.mxu0
  %v847 = vpack.c.bf16 %v820, %v817
  %v848 = vpack.c.bf16 %v828, %v825
  %v849 = vpack.c.bf16 %v836, %v833
  %v850 = vpack.c.bf16 %v844, %v841
  %851 = vmatprep.subr.bf16.mxu0 0
  %852 = vmatpush1.bf16.msra.mxu0 %v847
  %853 = vmatprep.subr.bf16.mxu0 0
  %854 = vmatpush1.bf16.msra.mxu0 %v848
  %855 = vmatprep.subr.bf16.mxu0 0
  %856 = vmatpush1.bf16.msra.mxu0 %v849
  %857 = vmatprep.subr.bf16.mxu0 0
  %858 = vmatpush1.bf16.msra.mxu0 %v850
  %859 = vmatprep.subr.bf16.mxu0 0
  %860 = vmatpush1.bf16.msra.mxu0 0
  %861 = vmatprep.subr.bf16.mxu0 0
  %862 = vmatpush1.bf16.msra.mxu0 0
  %863 = vmatprep.subr.bf16.mxu0 0
  %864 = vmatpush1.bf16.msra.mxu0 0
  %865 = vmatprep.subr.bf16.mxu0 0
  %866 = vmatpush1.bf16.msra.mxu0 0
  %867 = vmatprep.subr.bf16.mxu0 0
  %868 = vmatpush1.bf16.msra.mxu0 0
  %869 = vmatprep.subr.bf16.mxu0 0
  %870 = vmatpush1.bf16.msra.mxu0 0
  %871 = vmatprep.subr.bf16.mxu0 0
  %872 = vmatpush1.bf16.msra.mxu0 0
  %873 = vmatprep.subr.bf16.mxu0 0
  %874 = vmatpush1.bf16.msra.mxu0 0
  %875 = vmatprep.subr.bf16.mxu0 0
  %876 = vmatpush1.bf16.msra.mxu0 0
  %877 = vmatprep.subr.bf16.mxu0 0
  %878 = vmatpush1.bf16.msra.mxu0 0
  %879 = vmatprep.subr.bf16.mxu0 0
  %880 = vmatpush1.bf16.msra.mxu0 0
  %881 = vmatprep.subr.bf16.mxu0 0
  %882 = vmatpush1.bf16.msra.mxu0 0
  %883 = vmatprep.mubr.bf16.mxu0 0
  %884 = vmatmul.mubr.bf16.gmra.mrb[0].mxu0 %v268
  %v885 = vpop.f32.mrb[0].mxu0
  %v886 = vadd.f32 0.0, %v885
  %v887 = vpop.f32.mrb[0].mxu0
  %v888 = vpop.f32.mrb[0].mxu0
  %v889 = vadd.f32 0.0, %v888
  %v890 = vpop.f32.mrb[0].mxu0
  %891 = vmatprep.mubr.bf16.mxu0 0
  %892 = vmatmul.mubr.bf16.gmra.mrb[0].mxu0 %v271
  %v893 = vpop.f32.mrb[0].mxu0
  %v894 = vadd.f32 0.0, %v893
  %v895 = vpop.f32.mrb[0].mxu0
  %v896 = vpop.f32.mrb[0].mxu0
  %v897 = vadd.f32 0.0, %v896
  %v898 = vpop.f32.mrb[0].mxu0
  %899 = vmatprep.mubr.bf16.mxu0 0
  %900 = vmatmul.mubr.bf16.gmra.mrb[0].mxu0 %v274
  %v901 = vpop.f32.mrb[0].mxu0
  %v902 = vadd.f32 0.0, %v901
  %v903 = vpop.f32.mrb[0].mxu0
  %v904 = vpop.f32.mrb[0].mxu0
  %v905 = vadd.f32 0.0, %v904
  %v906 = vpop.f32.mrb[0].mxu0
  %907 = vmatprep.mubr.bf16.mxu0 0
  %908 = vmatmul.mubr.bf16.gmra.mrb[0].mxu0 %v277
  %v909 = vpop.f32.mrb[0].mxu0
  %v910 = vadd.f32 0.0, %v909
  %v911 = vpop.f32.mrb[0].mxu0
  %v912 = vpop.f32.mrb[0].mxu0
  %v913 = vadd.f32 0.0, %v912
  %v914 = vpop.f32.mrb[0].mxu0
  %915 = vdwg.mxu0
  %v916 = vadd.f32 %v886, %v889
  %v917 = vadd.f32 %v916, %v894
  %v918 = vadd.f32 %v917, %v897
  %v919 = vadd.f32 %v918, %v902
  %v920 = vadd.f32 %v919, %v905
  %v921 = vadd.f32 %v920, %v910
  %v922 = vadd.f32 %v921, %v913
  %v923 = vrot.slane %v922, 4
  %v924 = vadd.f32 %v922, %v923
  %v925 = vrot.slane %v924, 2
  %v926 = vadd.f32 %v924, %v925
  %v927 = vrot.slane %v926, 1
  %v928 = vadd.f32 %v926, %v927
  %v929 = vmul.f32 %v886, %v886
  %v930 = vmul.f32 %v889, %v889
  %v931 = vmul.f32 %v894, %v894
  %v932 = vmul.f32 %v897, %v897
  %v933 = vmul.f32 %v902, %v902
  %v934 = vmul.f32 %v905, %v905
  %v935 = vmul.f32 %v910, %v910
  %v936 = vmul.f32 %v913, %v913
  %v937 = vadd.f32 %v929, %v930
  %v938 = vadd.f32 %v937, %v931
  %v939 = vadd.f32 %v938, %v932
  %v940 = vadd.f32 %v939, %v933
  %v941 = vadd.f32 %v940, %v934
  %v942 = vadd.f32 %v941, %v935
  %v943 = vadd.f32 %v942, %v936
  %v944 = vrot.slane %v943, 4
  %v945 = vadd.f32 %v943, %v944
  %v946 = vrot.slane %v945, 2
  %v947 = vadd.f32 %v945, %v946
  %v948 = vrot.slane %v947, 1
  %v949 = vadd.f32 %v947, %v948
  %v950 = vmul.f32 %v928, 0.015625
  %v951 = vmul.f32 %v949, 0.015625
  %v952 = vmul.f32 %v950, %v950
  %v953 = vsub.f32 %v951, %v952
  %v954 = vmax.f32 %v953, 0.0
  %s955 = scalar_lea.vmem %s5, 2
  %v956 = vld [vmem:[%s955] sm:$0x1]
  %v957 = vadd.f32 %v954, 1e-05
  %v958 = vrsqrt.pop %v957
  %v959 = vmul.f32 %v956, %v958
  %s960 = scalar_lea.vmem %s6, 2
  %v961 = vld [vmem:[%s960] sm:$0x1]
  %v962 = vmul.f32 %v950, %v959
  %v963 = vsub.f32 %v961, %v962
  %v965 = vlaneseq
  %v966 = vshrl.u32 %v965, 7
  %v967 = vsub.s32 0, %v966
  %v968 = vrot.slane %v959, %v967
  %v970 = vmul.f32 %v886, %v968
  %v971 = vmul.f32 %v889, %v968
  %v972 = vmul.f32 %v894, %v968
  %v973 = vmul.f32 %v897, %v968
  %v974 = vmul.f32 %v902, %v968
  %v975 = vmul.f32 %v905, %v968
  %v976 = vmul.f32 %v910, %v968
  %v977 = vmul.f32 %v913, %v968
  %v979 = vlaneseq
  %v980 = vshrl.u32 %v979, 7
  %v981 = vsub.s32 0, %v980
  %v982 = vrot.slane %v963, %v981
  %v984 = vadd.f32 %v970, %v982
  %v985 = vadd.f32 %v971, %v982
  %v986 = vadd.f32 %v972, %v982
  %v987 = vadd.f32 %v973, %v982
  %v988 = vadd.f32 %v974, %v982
  %v989 = vadd.f32 %v975, %v982
  %v990 = vadd.f32 %v976, %v982
  %v991 = vadd.f32 %v977, %v982
  %v992 = vmax.f32 %v984, 0.0
  %v993 = vmax.f32 %v985, 0.0
  %v994 = vmax.f32 %v986, 0.0
  %v995 = vmax.f32 %v987, 0.0
  %v996 = vmax.f32 %v988, 0.0
  %v997 = vmax.f32 %v989, 0.0
  %v998 = vmax.f32 %v990, 0.0
  %v999 = vmax.f32 %v991, 0.0
  %v1000 = vpack.c.bf16 %v993, %v992
  %v1001 = vpack.c.bf16 %v995, %v994
  %v1002 = vpack.c.bf16 %v997, %v996
  %v1003 = vpack.c.bf16 %v999, %v998
  %s1004 = scalar_lea.vmem %s4, 192
  %v1005 = vld [vmem:[%s1004] sm:$0xf]
  %v1006 = vld [vmem:[%s1004 + $0x4] sm:$0xf]
  %v1007 = vld [vmem:[%s1004 + $0x8] sm:$0xf]
  %v1008 = vld [vmem:[%s1004 + $0xc] sm:$0xf]
  %v1009 = vld [vmem:[%s1004 + $0x10] sm:$0xf]
  %v1010 = vld [vmem:[%s1004 + $0x14] sm:$0xf]
  %v1011 = vld [vmem:[%s1004 + $0x18] sm:$0xf]
  %v1012 = vld [vmem:[%s1004 + $0x1c] sm:$0xf]
  %v1013 = vld [vmem:[%s1004 + $0x20] sm:$0xf]
  %v1014 = vld [vmem:[%s1004 + $0x24] sm:$0xf]
  %v1015 = vld [vmem:[%s1004 + $0x28] sm:$0xf]
  %v1016 = vld [vmem:[%s1004 + $0x2c] sm:$0xf]
  %v1017 = vld [vmem:[%s1004 + $0x30] sm:$0xf]
  %v1018 = vld [vmem:[%s1004 + $0x34] sm:$0xf]
  %v1019 = vld [vmem:[%s1004 + $0x38] sm:$0xf]
  %v1020 = vld [vmem:[%s1004 + $0x3c] sm:$0xf]
  %v1037 = vunpack.c.l.b16 %v1005
  %v1038 = vunpack.c.l.b16 %v1006
  %v1039 = vunpack.c.l.b16 %v1007
  %v1040 = vunpack.c.l.b16 %v1008
  %v1041 = vunpack.c.l.b16 %v1009
  %v1042 = vunpack.c.l.b16 %v1010
  %v1043 = vunpack.c.l.b16 %v1011
  %v1044 = vunpack.c.l.b16 %v1012
  %v1045 = vunpack.c.l.b16 %v1013
  %v1046 = vunpack.c.l.b16 %v1014
  %v1047 = vunpack.c.l.b16 %v1015
  %v1048 = vunpack.c.l.b16 %v1016
  %v1049 = vunpack.c.l.b16 %v1017
  %v1050 = vunpack.c.l.b16 %v1018
  %v1051 = vunpack.c.l.b16 %v1019
  %v1052 = vunpack.c.l.b16 %v1020
  %v1053 = vpack.c.b16 %v1038, %v1037
  %v1054 = vpack.c.b16 %v1040, %v1039
  %v1055 = vpack.c.b16 %v1042, %v1041
  %v1056 = vpack.c.b16 %v1044, %v1043
  %v1057 = vpack.c.b16 %v1046, %v1045
  %v1058 = vpack.c.b16 %v1048, %v1047
  %v1059 = vpack.c.b16 %v1050, %v1049
  %v1060 = vpack.c.b16 %v1052, %v1051
  %1069 = vmatprep.subr.bf16.mxu0 0
  %1070 = vmatpush1.bf16.msra.mxu0 %v1053
  %1071 = vmatprep.subr.bf16.mxu0 0
  %1072 = vmatpush1.bf16.msra.mxu0 %v1054
  %1073 = vmatprep.subr.bf16.mxu0 0
  %1074 = vmatpush1.bf16.msra.mxu0 %v1055
  %1075 = vmatprep.subr.bf16.mxu0 0
  %1076 = vmatpush1.bf16.msra.mxu0 %v1056
  %1077 = vmatprep.subr.bf16.mxu0 0
  %1078 = vmatpush1.bf16.msra.mxu0 %v1057
  %1079 = vmatprep.subr.bf16.mxu0 0
  %1080 = vmatpush1.bf16.msra.mxu0 %v1058
  %1081 = vmatprep.subr.bf16.mxu0 0
  %1082 = vmatpush1.bf16.msra.mxu0 %v1059
  %1083 = vmatprep.subr.bf16.mxu0 0
  %1084 = vmatpush1.bf16.msra.mxu0 %v1060
  %1085 = vmatprep.subr.bf16.mxu0 0
  %1086 = vmatpush1.bf16.msra.mxu0 0
  %1087 = vmatprep.subr.bf16.mxu0 0
  %1088 = vmatpush1.bf16.msra.mxu0 0
  %1089 = vmatprep.subr.bf16.mxu0 0
  %1090 = vmatpush1.bf16.msra.mxu0 0
  %1091 = vmatprep.subr.bf16.mxu0 0
  %1092 = vmatpush1.bf16.msra.mxu0 0
  %1093 = vmatprep.subr.bf16.mxu0 0
  %1094 = vmatpush1.bf16.msra.mxu0 0
  %1095 = vmatprep.subr.bf16.mxu0 0
  %1096 = vmatpush1.bf16.msra.mxu0 0
  %1097 = vmatprep.subr.bf16.mxu0 0
  %1098 = vmatpush1.bf16.msra.mxu0 0
  %1099 = vmatprep.subr.bf16.mxu0 0
  %1100 = vmatpush1.bf16.msra.mxu0 0
  %1101 = vmatprep.mubr.bf16.mxu0 0
  %1102 = vmatmul.mubr.bf16.gmra.mrb[0].mxu0 %v1000
  %v1103 = vpop.f32.mrb[0].mxu0
  %v1104 = vadd.f32 0.0, %v1103
  %v1105 = vpop.f32.mrb[0].mxu0
  %v1106 = vpop.f32.mrb[0].mxu0
  %v1107 = vadd.f32 0.0, %v1106
  %v1108 = vpop.f32.mrb[0].mxu0
  %1109 = vmatprep.mubr.bf16.mxu0 0
  %1110 = vmatmul.mubr.bf16.gmra.mrb[0].mxu0 %v1001
  %v1111 = vpop.f32.mrb[0].mxu0
  %v1112 = vadd.f32 0.0, %v1111
  %v1113 = vpop.f32.mrb[0].mxu0
  %v1114 = vpop.f32.mrb[0].mxu0
  %v1115 = vadd.f32 0.0, %v1114
  %v1116 = vpop.f32.mrb[0].mxu0
  %1117 = vmatprep.mubr.bf16.mxu0 0
  %1118 = vmatmul.mubr.bf16.gmra.mrb[0].mxu0 %v1002
  %v1119 = vpop.f32.mrb[0].mxu0
  %v1120 = vadd.f32 0.0, %v1119
  %v1121 = vpop.f32.mrb[0].mxu0
  %v1122 = vpop.f32.mrb[0].mxu0
  %v1123 = vadd.f32 0.0, %v1122
  %v1124 = vpop.f32.mrb[0].mxu0
  %1125 = vmatprep.mubr.bf16.mxu0 0
  %1126 = vmatmul.mubr.bf16.gmra.mrb[0].mxu0 %v1003
  %v1127 = vpop.f32.mrb[0].mxu0
  %v1128 = vadd.f32 0.0, %v1127
  %v1129 = vpop.f32.mrb[0].mxu0
  %v1130 = vpop.f32.mrb[0].mxu0
  %v1131 = vadd.f32 0.0, %v1130
  %v1132 = vpop.f32.mrb[0].mxu0
  %1133 = vdwg.mxu0
  %v1134 = vpack.c.bf16 %v1107, %v1104
  %v1135 = vpack.c.bf16 %v1115, %v1112
  %v1136 = vpack.c.bf16 %v1123, %v1120
  %v1137 = vpack.c.bf16 %v1131, %v1128
  %1138 = vmatprep.subr.bf16.mxu0 0
  %1139 = vmatpush1.bf16.msra.mxu0 %v1134
  %1140 = vmatprep.subr.bf16.mxu0 0
  %1141 = vmatpush1.bf16.msra.mxu0 %v1135
  %1142 = vmatprep.subr.bf16.mxu0 0
  %1143 = vmatpush1.bf16.msra.mxu0 %v1136
  %1144 = vmatprep.subr.bf16.mxu0 0
  %1145 = vmatpush1.bf16.msra.mxu0 %v1137
  %1146 = vmatprep.subr.bf16.mxu0 0
  %1147 = vmatpush1.bf16.msra.mxu0 0
  %1148 = vmatprep.subr.bf16.mxu0 0
  %1149 = vmatpush1.bf16.msra.mxu0 0
  %1150 = vmatprep.subr.bf16.mxu0 0
  %1151 = vmatpush1.bf16.msra.mxu0 0
  %1152 = vmatprep.subr.bf16.mxu0 0
  %1153 = vmatpush1.bf16.msra.mxu0 0
  %1154 = vmatprep.subr.bf16.mxu0 0
  %1155 = vmatpush1.bf16.msra.mxu0 0
  %1156 = vmatprep.subr.bf16.mxu0 0
  %1157 = vmatpush1.bf16.msra.mxu0 0
  %1158 = vmatprep.subr.bf16.mxu0 0
  %1159 = vmatpush1.bf16.msra.mxu0 0
  %1160 = vmatprep.subr.bf16.mxu0 0
  %1161 = vmatpush1.bf16.msra.mxu0 0
  %1162 = vmatprep.subr.bf16.mxu0 0
  %1163 = vmatpush1.bf16.msra.mxu0 0
  %1164 = vmatprep.subr.bf16.mxu0 0
  %1165 = vmatpush1.bf16.msra.mxu0 0
  %1166 = vmatprep.subr.bf16.mxu0 0
  %1167 = vmatpush1.bf16.msra.mxu0 0
  %1168 = vmatprep.subr.bf16.mxu0 0
  %1169 = vmatpush1.bf16.msra.mxu0 0
  %1170 = vmatprep.mubr.bf16.mxu0 0
  %1171 = vmatmul.mubr.bf16.gmra.mrb[0].mxu0 %v268
  %v1172 = vpop.f32.mrb[0].mxu0
  %v1173 = vadd.f32 0.0, %v1172
  %v1174 = vpop.f32.mrb[0].mxu0
  %v1175 = vpop.f32.mrb[0].mxu0
  %v1176 = vadd.f32 0.0, %v1175
  %v1177 = vpop.f32.mrb[0].mxu0
  %1178 = vmatprep.mubr.bf16.mxu0 0
  %1179 = vmatmul.mubr.bf16.gmra.mrb[0].mxu0 %v271
  %v1180 = vpop.f32.mrb[0].mxu0
  %v1181 = vadd.f32 0.0, %v1180
  %v1182 = vpop.f32.mrb[0].mxu0
  %v1183 = vpop.f32.mrb[0].mxu0
  %v1184 = vadd.f32 0.0, %v1183
  %v1185 = vpop.f32.mrb[0].mxu0
  %1186 = vmatprep.mubr.bf16.mxu0 0
  %1187 = vmatmul.mubr.bf16.gmra.mrb[0].mxu0 %v274
  %v1188 = vpop.f32.mrb[0].mxu0
  %v1189 = vadd.f32 0.0, %v1188
  %v1190 = vpop.f32.mrb[0].mxu0
  %v1191 = vpop.f32.mrb[0].mxu0
  %v1192 = vadd.f32 0.0, %v1191
  %v1193 = vpop.f32.mrb[0].mxu0
  %1194 = vmatprep.mubr.bf16.mxu0 0
  %1195 = vmatmul.mubr.bf16.gmra.mrb[0].mxu0 %v277
  %v1196 = vpop.f32.mrb[0].mxu0
  %v1197 = vadd.f32 0.0, %v1196
  %v1198 = vpop.f32.mrb[0].mxu0
  %v1199 = vpop.f32.mrb[0].mxu0
  %v1200 = vadd.f32 0.0, %v1199
  %v1201 = vpop.f32.mrb[0].mxu0
  %1202 = vdwg.mxu0
  %v1203 = vadd.f32 %v1173, %v1176
  %v1204 = vadd.f32 %v1203, %v1181
  %v1205 = vadd.f32 %v1204, %v1184
  %v1206 = vadd.f32 %v1205, %v1189
  %v1207 = vadd.f32 %v1206, %v1192
  %v1208 = vadd.f32 %v1207, %v1197
  %v1209 = vadd.f32 %v1208, %v1200
  %v1210 = vrot.slane %v1209, 4
  %v1211 = vadd.f32 %v1209, %v1210
  %v1212 = vrot.slane %v1211, 2
  %v1213 = vadd.f32 %v1211, %v1212
  %v1214 = vrot.slane %v1213, 1
  %v1215 = vadd.f32 %v1213, %v1214
  %v1216 = vmul.f32 %v1173, %v1173
  %v1217 = vmul.f32 %v1176, %v1176
  %v1218 = vmul.f32 %v1181, %v1181
  %v1219 = vmul.f32 %v1184, %v1184
  %v1220 = vmul.f32 %v1189, %v1189
  %v1221 = vmul.f32 %v1192, %v1192
  %v1222 = vmul.f32 %v1197, %v1197
  %v1223 = vmul.f32 %v1200, %v1200
  %v1224 = vadd.f32 %v1216, %v1217
  %v1225 = vadd.f32 %v1224, %v1218
  %v1226 = vadd.f32 %v1225, %v1219
  %v1227 = vadd.f32 %v1226, %v1220
  %v1228 = vadd.f32 %v1227, %v1221
  %v1229 = vadd.f32 %v1228, %v1222
  %v1230 = vadd.f32 %v1229, %v1223
  %v1231 = vrot.slane %v1230, 4
  %v1232 = vadd.f32 %v1230, %v1231
  %v1233 = vrot.slane %v1232, 2
  %v1234 = vadd.f32 %v1232, %v1233
  %v1235 = vrot.slane %v1234, 1
  %v1236 = vadd.f32 %v1234, %v1235
  %v1237 = vmul.f32 %v1215, 0.015625
  %v1238 = vmul.f32 %v1236, 0.015625
  %v1239 = vmul.f32 %v1237, %v1237
  %v1240 = vsub.f32 %v1238, %v1239
  %v1241 = vmax.f32 %v1240, 0.0
  %s1242 = scalar_lea.vmem %s5, 3
  %v1243 = vld [vmem:[%s1242] sm:$0x1]
  %v1244 = vadd.f32 %v1241, 1e-05
  %v1245 = vrsqrt.pop %v1244
  %v1246 = vmul.f32 %v1243, %v1245
  %s1247 = scalar_lea.vmem %s6, 3
  %v1248 = vld [vmem:[%s1247] sm:$0x1]
  %v1249 = vmul.f32 %v1237, %v1246
  %v1250 = vsub.f32 %v1248, %v1249
  %v1252 = vlaneseq
  %v1253 = vshrl.u32 %v1252, 7
  %v1254 = vsub.s32 0, %v1253
  %v1255 = vrot.slane %v1246, %v1254
  %v1257 = vmul.f32 %v1173, %v1255
  %v1258 = vmul.f32 %v1176, %v1255
  %v1259 = vmul.f32 %v1181, %v1255
  %v1260 = vmul.f32 %v1184, %v1255
  %v1261 = vmul.f32 %v1189, %v1255
  %v1262 = vmul.f32 %v1192, %v1255
  %v1263 = vmul.f32 %v1197, %v1255
  %v1264 = vmul.f32 %v1200, %v1255
  %v1266 = vlaneseq
  %v1267 = vshrl.u32 %v1266, 7
  %v1268 = vsub.s32 0, %v1267
  %v1269 = vrot.slane %v1250, %v1268
  %v1271 = vadd.f32 %v1257, %v1269
  %v1272 = vadd.f32 %v1258, %v1269
  %v1273 = vadd.f32 %v1259, %v1269
  %v1274 = vadd.f32 %v1260, %v1269
  %v1275 = vadd.f32 %v1261, %v1269
  %v1276 = vadd.f32 %v1262, %v1269
  %v1277 = vadd.f32 %v1263, %v1269
  %v1278 = vadd.f32 %v1264, %v1269
  %v1279 = vmax.f32 %v1271, 0.0
  %v1280 = vmax.f32 %v1272, 0.0
  %v1281 = vmax.f32 %v1273, 0.0
  %v1282 = vmax.f32 %v1274, 0.0
  %v1283 = vmax.f32 %v1275, 0.0
  %v1284 = vmax.f32 %v1276, 0.0
  %v1285 = vmax.f32 %v1277, 0.0
  %v1286 = vmax.f32 %v1278, 0.0
  %v1287 = vpack.c.bf16 %v1280, %v1279
  %v1288 = vpack.c.bf16 %v1282, %v1281
  %v1289 = vpack.c.bf16 %v1284, %v1283
  %v1290 = vpack.c.bf16 %v1286, %v1285
  %s1291 = scalar_lea.vmem %s4, 256
  %v1292 = vld [vmem:[%s1291] sm:$0xf]
  %v1293 = vld [vmem:[%s1291 + $0x4] sm:$0xf]
  %v1294 = vld [vmem:[%s1291 + $0x8] sm:$0xf]
  %v1295 = vld [vmem:[%s1291 + $0xc] sm:$0xf]
  %v1296 = vld [vmem:[%s1291 + $0x10] sm:$0xf]
  %v1297 = vld [vmem:[%s1291 + $0x14] sm:$0xf]
  %v1298 = vld [vmem:[%s1291 + $0x18] sm:$0xf]
  %v1299 = vld [vmem:[%s1291 + $0x1c] sm:$0xf]
  %v1300 = vld [vmem:[%s1291 + $0x20] sm:$0xf]
  %v1301 = vld [vmem:[%s1291 + $0x24] sm:$0xf]
  %v1302 = vld [vmem:[%s1291 + $0x28] sm:$0xf]
  %v1303 = vld [vmem:[%s1291 + $0x2c] sm:$0xf]
  %v1304 = vld [vmem:[%s1291 + $0x30] sm:$0xf]
  %v1305 = vld [vmem:[%s1291 + $0x34] sm:$0xf]
  %v1306 = vld [vmem:[%s1291 + $0x38] sm:$0xf]
  %v1307 = vld [vmem:[%s1291 + $0x3c] sm:$0xf]
  %v1324 = vunpack.c.l.b16 %v1292
  %v1325 = vunpack.c.l.b16 %v1293
  %v1326 = vunpack.c.l.b16 %v1294
  %v1327 = vunpack.c.l.b16 %v1295
  %v1328 = vunpack.c.l.b16 %v1296
  %v1329 = vunpack.c.l.b16 %v1297
  %v1330 = vunpack.c.l.b16 %v1298
  %v1331 = vunpack.c.l.b16 %v1299
  %v1332 = vunpack.c.l.b16 %v1300
  %v1333 = vunpack.c.l.b16 %v1301
  %v1334 = vunpack.c.l.b16 %v1302
  %v1335 = vunpack.c.l.b16 %v1303
  %v1336 = vunpack.c.l.b16 %v1304
  %v1337 = vunpack.c.l.b16 %v1305
  %v1338 = vunpack.c.l.b16 %v1306
  %v1339 = vunpack.c.l.b16 %v1307
  %v1340 = vpack.c.b16 %v1325, %v1324
  %v1341 = vpack.c.b16 %v1327, %v1326
  %v1342 = vpack.c.b16 %v1329, %v1328
  %v1343 = vpack.c.b16 %v1331, %v1330
  %v1344 = vpack.c.b16 %v1333, %v1332
  %v1345 = vpack.c.b16 %v1335, %v1334
  %v1346 = vpack.c.b16 %v1337, %v1336
  %v1347 = vpack.c.b16 %v1339, %v1338
  %1356 = vmatprep.subr.bf16.mxu0 0
  %1357 = vmatpush1.bf16.msra.mxu0 %v1340
  %1358 = vmatprep.subr.bf16.mxu0 0
  %1359 = vmatpush1.bf16.msra.mxu0 %v1341
  %1360 = vmatprep.subr.bf16.mxu0 0
  %1361 = vmatpush1.bf16.msra.mxu0 %v1342
  %1362 = vmatprep.subr.bf16.mxu0 0
  %1363 = vmatpush1.bf16.msra.mxu0 %v1343
  %1364 = vmatprep.subr.bf16.mxu0 0
  %1365 = vmatpush1.bf16.msra.mxu0 %v1344
  %1366 = vmatprep.subr.bf16.mxu0 0
  %1367 = vmatpush1.bf16.msra.mxu0 %v1345
  %1368 = vmatprep.subr.bf16.mxu0 0
  %1369 = vmatpush1.bf16.msra.mxu0 %v1346
  %1370 = vmatprep.subr.bf16.mxu0 0
  %1371 = vmatpush1.bf16.msra.mxu0 %v1347
  %1372 = vmatprep.subr.bf16.mxu0 0
  %1373 = vmatpush1.bf16.msra.mxu0 0
  %1374 = vmatprep.subr.bf16.mxu0 0
  %1375 = vmatpush1.bf16.msra.mxu0 0
  %1376 = vmatprep.subr.bf16.mxu0 0
  %1377 = vmatpush1.bf16.msra.mxu0 0
  %1378 = vmatprep.subr.bf16.mxu0 0
  %1379 = vmatpush1.bf16.msra.mxu0 0
  %1380 = vmatprep.subr.bf16.mxu0 0
  %1381 = vmatpush1.bf16.msra.mxu0 0
  %1382 = vmatprep.subr.bf16.mxu0 0
  %1383 = vmatpush1.bf16.msra.mxu0 0
  %1384 = vmatprep.subr.bf16.mxu0 0
  %1385 = vmatpush1.bf16.msra.mxu0 0
  %1386 = vmatprep.subr.bf16.mxu0 0
  %1387 = vmatpush1.bf16.msra.mxu0 0
  %1388 = vmatprep.mubr.bf16.mxu0 0
  %1389 = vmatmul.mubr.bf16.gmra.mrb[0].mxu0 %v1287
  %v1390 = vpop.f32.mrb[0].mxu0
  %v1391 = vadd.f32 0.0, %v1390
  %v1392 = vpop.f32.mrb[0].mxu0
  %v1393 = vpop.f32.mrb[0].mxu0
  %v1394 = vadd.f32 0.0, %v1393
  %v1395 = vpop.f32.mrb[0].mxu0
  %1396 = vmatprep.mubr.bf16.mxu0 0
  %1397 = vmatmul.mubr.bf16.gmra.mrb[0].mxu0 %v1288
  %v1398 = vpop.f32.mrb[0].mxu0
  %v1399 = vadd.f32 0.0, %v1398
  %v1400 = vpop.f32.mrb[0].mxu0
  %v1401 = vpop.f32.mrb[0].mxu0
  %v1402 = vadd.f32 0.0, %v1401
  %v1403 = vpop.f32.mrb[0].mxu0
  %1404 = vmatprep.mubr.bf16.mxu0 0
  %1405 = vmatmul.mubr.bf16.gmra.mrb[0].mxu0 %v1289
  %v1406 = vpop.f32.mrb[0].mxu0
  %v1407 = vadd.f32 0.0, %v1406
  %v1408 = vpop.f32.mrb[0].mxu0
  %v1409 = vpop.f32.mrb[0].mxu0
  %v1410 = vadd.f32 0.0, %v1409
  %v1411 = vpop.f32.mrb[0].mxu0
  %1412 = vmatprep.mubr.bf16.mxu0 0
  %1413 = vmatmul.mubr.bf16.gmra.mrb[0].mxu0 %v1290
  %v1414 = vpop.f32.mrb[0].mxu0
  %v1415 = vadd.f32 0.0, %v1414
  %v1416 = vpop.f32.mrb[0].mxu0
  %v1417 = vpop.f32.mrb[0].mxu0
  %v1418 = vadd.f32 0.0, %v1417
  %v1419 = vpop.f32.mrb[0].mxu0
  %1420 = vdwg.mxu0
  %v1421 = vpack.c.bf16 %v1394, %v1391
  %v1422 = vpack.c.bf16 %v1402, %v1399
  %v1423 = vpack.c.bf16 %v1410, %v1407
  %v1424 = vpack.c.bf16 %v1418, %v1415
  %1425 = vmatprep.subr.bf16.mxu0 0
  %1426 = vmatpush1.bf16.msra.mxu0 %v1421
  %1427 = vmatprep.subr.bf16.mxu0 0
  %1428 = vmatpush1.bf16.msra.mxu0 %v1422
  %1429 = vmatprep.subr.bf16.mxu0 0
  %1430 = vmatpush1.bf16.msra.mxu0 %v1423
  %1431 = vmatprep.subr.bf16.mxu0 0
  %1432 = vmatpush1.bf16.msra.mxu0 %v1424
  %1433 = vmatprep.subr.bf16.mxu0 0
  %1434 = vmatpush1.bf16.msra.mxu0 0
  %1435 = vmatprep.subr.bf16.mxu0 0
  %1436 = vmatpush1.bf16.msra.mxu0 0
  %1437 = vmatprep.subr.bf16.mxu0 0
  %1438 = vmatpush1.bf16.msra.mxu0 0
  %1439 = vmatprep.subr.bf16.mxu0 0
  %1440 = vmatpush1.bf16.msra.mxu0 0
  %1441 = vmatprep.subr.bf16.mxu0 0
  %1442 = vmatpush1.bf16.msra.mxu0 0
  %1443 = vmatprep.subr.bf16.mxu0 0
  %1444 = vmatpush1.bf16.msra.mxu0 0
  %1445 = vmatprep.subr.bf16.mxu0 0
  %1446 = vmatpush1.bf16.msra.mxu0 0
  %1447 = vmatprep.subr.bf16.mxu0 0
  %1448 = vmatpush1.bf16.msra.mxu0 0
  %1449 = vmatprep.subr.bf16.mxu0 0
  %1450 = vmatpush1.bf16.msra.mxu0 0
  %1451 = vmatprep.subr.bf16.mxu0 0
  %1452 = vmatpush1.bf16.msra.mxu0 0
  %1453 = vmatprep.subr.bf16.mxu0 0
  %1454 = vmatpush1.bf16.msra.mxu0 0
  %1455 = vmatprep.subr.bf16.mxu0 0
  %1456 = vmatpush1.bf16.msra.mxu0 0
  %1457 = vmatprep.mubr.bf16.mxu0 0
  %1458 = vmatmul.mubr.bf16.gmra.mrb[0].mxu0 %v268
  %v1459 = vpop.f32.mrb[0].mxu0
  %v1460 = vadd.f32 0.0, %v1459
  %v1461 = vpop.f32.mrb[0].mxu0
  %v1462 = vpop.f32.mrb[0].mxu0
  %v1463 = vadd.f32 0.0, %v1462
  %v1464 = vpop.f32.mrb[0].mxu0
  %1465 = vmatprep.mubr.bf16.mxu0 0
  %1466 = vmatmul.mubr.bf16.gmra.mrb[0].mxu0 %v271
  %v1467 = vpop.f32.mrb[0].mxu0
  %v1468 = vadd.f32 0.0, %v1467
  %v1469 = vpop.f32.mrb[0].mxu0
  %v1470 = vpop.f32.mrb[0].mxu0
  %v1471 = vadd.f32 0.0, %v1470
  %v1472 = vpop.f32.mrb[0].mxu0
  %1473 = vmatprep.mubr.bf16.mxu0 0
  %1474 = vmatmul.mubr.bf16.gmra.mrb[0].mxu0 %v274
  %v1475 = vpop.f32.mrb[0].mxu0
  %v1476 = vadd.f32 0.0, %v1475
  %v1477 = vpop.f32.mrb[0].mxu0
  %v1478 = vpop.f32.mrb[0].mxu0
  %v1479 = vadd.f32 0.0, %v1478
  %v1480 = vpop.f32.mrb[0].mxu0
  %1481 = vmatprep.mubr.bf16.mxu0 0
  %1482 = vmatmul.mubr.bf16.gmra.mrb[0].mxu0 %v277
  %v1483 = vpop.f32.mrb[0].mxu0
  %v1484 = vadd.f32 0.0, %v1483
  %v1485 = vpop.f32.mrb[0].mxu0
  %v1486 = vpop.f32.mrb[0].mxu0
  %v1487 = vadd.f32 0.0, %v1486
  %v1488 = vpop.f32.mrb[0].mxu0
  %1489 = vdwg.mxu0
  %v1490 = vadd.f32 %v1460, %v1463
  %v1491 = vadd.f32 %v1490, %v1468
  %v1492 = vadd.f32 %v1491, %v1471
  %v1493 = vadd.f32 %v1492, %v1476
  %v1494 = vadd.f32 %v1493, %v1479
  %v1495 = vadd.f32 %v1494, %v1484
  %v1496 = vadd.f32 %v1495, %v1487
  %v1497 = vrot.slane %v1496, 4
  %v1498 = vadd.f32 %v1496, %v1497
  %v1499 = vrot.slane %v1498, 2
  %v1500 = vadd.f32 %v1498, %v1499
  %v1501 = vrot.slane %v1500, 1
  %v1502 = vadd.f32 %v1500, %v1501
  %v1503 = vmul.f32 %v1460, %v1460
  %v1504 = vmul.f32 %v1463, %v1463
  %v1505 = vmul.f32 %v1468, %v1468
  %v1506 = vmul.f32 %v1471, %v1471
  %v1507 = vmul.f32 %v1476, %v1476
  %v1508 = vmul.f32 %v1479, %v1479
  %v1509 = vmul.f32 %v1484, %v1484
  %v1510 = vmul.f32 %v1487, %v1487
  %v1511 = vadd.f32 %v1503, %v1504
  %v1512 = vadd.f32 %v1511, %v1505
  %v1513 = vadd.f32 %v1512, %v1506
  %v1514 = vadd.f32 %v1513, %v1507
  %v1515 = vadd.f32 %v1514, %v1508
  %v1516 = vadd.f32 %v1515, %v1509
  %v1517 = vadd.f32 %v1516, %v1510
  %v1518 = vrot.slane %v1517, 4
  %v1519 = vadd.f32 %v1517, %v1518
  %v1520 = vrot.slane %v1519, 2
  %v1521 = vadd.f32 %v1519, %v1520
  %v1522 = vrot.slane %v1521, 1
  %v1523 = vadd.f32 %v1521, %v1522
  %v1524 = vmul.f32 %v1502, 0.015625
  %v1525 = vmul.f32 %v1523, 0.015625
  %v1526 = vmul.f32 %v1524, %v1524
  %v1527 = vsub.f32 %v1525, %v1526
  %v1528 = vmax.f32 %v1527, 0.0
  %s1529 = scalar_lea.vmem %s5, 4
  %v1530 = vld [vmem:[%s1529] sm:$0x1]
  %v1531 = vadd.f32 %v1528, 1e-05
  %v1532 = vrsqrt.pop %v1531
  %v1533 = vmul.f32 %v1530, %v1532
  %s1534 = scalar_lea.vmem %s6, 4
  %v1535 = vld [vmem:[%s1534] sm:$0x1]
  %v1536 = vmul.f32 %v1524, %v1533
  %v1537 = vsub.f32 %v1535, %v1536
  %v1539 = vlaneseq
  %v1540 = vshrl.u32 %v1539, 7
  %v1541 = vsub.s32 0, %v1540
  %v1542 = vrot.slane %v1533, %v1541
  %v1544 = vmul.f32 %v1460, %v1542
  %v1545 = vmul.f32 %v1463, %v1542
  %v1546 = vmul.f32 %v1468, %v1542
  %v1547 = vmul.f32 %v1471, %v1542
  %v1548 = vmul.f32 %v1476, %v1542
  %v1549 = vmul.f32 %v1479, %v1542
  %v1550 = vmul.f32 %v1484, %v1542
  %v1551 = vmul.f32 %v1487, %v1542
  %v1553 = vlaneseq
  %v1554 = vshrl.u32 %v1553, 7
  %v1555 = vsub.s32 0, %v1554
  %v1556 = vrot.slane %v1537, %v1555
  %v1558 = vadd.f32 %v1544, %v1556
  %v1559 = vadd.f32 %v1545, %v1556
  %v1560 = vadd.f32 %v1546, %v1556
  %v1561 = vadd.f32 %v1547, %v1556
  %v1562 = vadd.f32 %v1548, %v1556
  %v1563 = vadd.f32 %v1549, %v1556
  %v1564 = vadd.f32 %v1550, %v1556
  %v1565 = vadd.f32 %v1551, %v1556
  %v1566 = vld [vmem:[%s7] sm:$0xf]
  %v1567 = vpack.c.bf16 %v1559, %v1558
  %v1568 = vpack.c.bf16 %v1561, %v1560
  %v1569 = vpack.c.bf16 %v1563, %v1562
  %v1570 = vpack.c.bf16 %v1565, %v1564
  %v1572 = vsel %vm266, %v1566, 0
  %1574 = vmatprep.subr.bf16.mxu0 0
  %1575 = vmatpush1.bf16.msra.mxu0 %v1567
  %1576 = vmatprep.subr.bf16.mxu0 0
  %1577 = vmatpush1.bf16.msra.mxu0 %v1568
  %1578 = vmatprep.subr.bf16.mxu0 0
  %1579 = vmatpush1.bf16.msra.mxu0 %v1569
  %1580 = vmatprep.subr.bf16.mxu0 0
  %1581 = vmatpush1.bf16.msra.mxu0 %v1570
  %1582 = vmatprep.subr.bf16.mxu0 0
  %1583 = vmatpush1.bf16.msra.mxu0 0
  %1584 = vmatprep.subr.bf16.mxu0 0
  %1585 = vmatpush1.bf16.msra.mxu0 0
  %1586 = vmatprep.subr.bf16.mxu0 0
  %1587 = vmatpush1.bf16.msra.mxu0 0
  %1588 = vmatprep.subr.bf16.mxu0 0
  %1589 = vmatpush1.bf16.msra.mxu0 0
  %1590 = vmatprep.subr.bf16.mxu0 0
  %1591 = vmatpush1.bf16.msra.mxu0 0
  %1592 = vmatprep.subr.bf16.mxu0 0
  %1593 = vmatpush1.bf16.msra.mxu0 0
  %1594 = vmatprep.subr.bf16.mxu0 0
  %1595 = vmatpush1.bf16.msra.mxu0 0
  %1596 = vmatprep.subr.bf16.mxu0 0
  %1597 = vmatpush1.bf16.msra.mxu0 0
  %1598 = vmatprep.subr.bf16.mxu0 0
  %1599 = vmatpush1.bf16.msra.mxu0 0
  %1600 = vmatprep.subr.bf16.mxu0 0
  %1601 = vmatpush1.bf16.msra.mxu0 0
  %1602 = vmatprep.subr.bf16.mxu0 0
  %1603 = vmatpush1.bf16.msra.mxu0 0
  %1604 = vmatprep.subr.bf16.mxu0 0
  %1605 = vmatpush1.bf16.msra.mxu0 0
  %1606 = vmatprep.mubr.bf16.mxu0 0
  %1607 = vmatmul.mubr.bf16.gmra.mrb[0].mxu0 %v1572
  %v1608 = vpop.f32.mrb[0].mxu0
  %v1609 = vadd.f32 0.0, %v1608
  %v1610 = vpop.f32.mrb[0].mxu0
  %v1611 = vpop.f32.mrb[0].mxu0
  %v1612 = vpop.f32.mrb[0].mxu0
  %1613 = vdwg.mxu0
  %1614 = vst [vmem:[%s8] sm:$0xff] %v1609
  // Predicated region
  $region34: #{gnn_msp_forward.1} parent=0 // pred_check
    _
  $region35: #{gnn_msp_forward.1} parent=0 // pred_check_branch
    %1616 = sbr.rel (0) target = $region37
  $region36: #{gnn_msp_forward.1} parent=0 // pred_region
    _
  $region37: #{gnn_msp_forward.1} parent=0 // pred_fallthru
    _
  // Predicated region
  $region38: #{gnn_msp_forward.1} parent=0 // pred_check
    _
  $region39: #{gnn_msp_forward.1} parent=0 // pred_check_branch
    %1618 = sbr.rel (0) target = $region41
  $region40: #{gnn_msp_forward.1} parent=0 // pred_region
    _
  $region41: #{gnn_msp_forward.1} parent=0 // pred_fallthru
    _

</llo_original>
